<compile_context>
chip_gen: v6e
topology: v6e:2x2x1
jax: 0.10.0
libtpu: 0.0.40
codegen_flags: <defaults>
</compile_context>

<pallas_src>
import jax
import jax.numpy as jnp
from jax import lax
from jax.experimental import pallas as pl
from jax.experimental.pallas import tpu as pltpu

# --------------------------- model hyper-parameters -------------------------
EMBED_DIM   = 32
POS_DIM     = 1
GRID_SIZE   = 100       # matches the reference default grid_size=100
NUM_STEPS   = 4         # unified dynamics evolution steps
MAX_SEQ_LEN = 512
LN_EPS      = 1e-5

SIGMA = 0.2             # RBF kernel width           (FieldProjector param)
DT    = 0.1             # evolution time step         (UnifiedFieldDynamics)


# ------------------------------ Pallas kernel -------------------------------
def tfn_layer_kernel(pos_ref,    # (BT, 1, N) token positions (lane-dense on N)
                     emb_ref,    # (BT, N, D) embeddings (+ positional emb)
                     wp_ref,     # (D, D)     output_proj weight^T, bf16
                     par_ref,    # (8, D)     packed per-channel params
                     out_ref):   # (BT, N, D) output
    BT, N, D = emb_ref.shape
    G = GRID_SIZE

    emb = emb_ref[...]                           # (BT, N, D) f32
    pos = pos_ref[...]                           # (BT, 1, N) f32

    # packed rows: [b_out, ln1_g, ln1_b, ln2_g, ln2_b, dt*alpha, dt*beta, pad]
    par   = par_ref[...]                         # (8, D)
    b_out = par[0:1, :]
    ln1_g = par[1:2, :]
    ln1_b = par[2:3, :]
    ln2_g = par[3:4, :]
    ln2_b = par[4:5, :]
    dt_alpha = par[5:6, :].reshape(1, 1, D)      # implicit (1,1,D) broadcast
    dt_beta  = par[6:7, :].reshape(1, 1, D)

    # -------- 1. FieldProjector: RBF projection onto a uniform grid ---------
    # Grid coordinate z_g = g / (G-1) built as a tiny (1, G, 1) vector.
    gcoord = (lax.broadcasted_iota(jnp.int32, (1, G, 1), 1).astype(jnp.float32)
              * (1.0 / (G - 1)))
    diff = gcoord - pos                                             # (BT, G, N)
    K = jnp.exp(-(diff * diff) * (0.5 / (SIGMA * SIGMA)))
    # TODO(synk): reference FieldProjector may normalize K; unnormalized here.
    field = jnp.einsum('bgn,bnd->bgd',
                       K.astype(jnp.bfloat16), emb.astype(jnp.bfloat16),
                       preferred_element_type=jnp.float32)          # (BT, G, D)

    # -------- 2. UnifiedFieldDynamics: diffusion + interference -------------
    # TODO(synk): exact interference/constraint terms of the reference are
    # unknown; diffusion Laplacian (replicate boundary) + mean-field coupling.
    # Matrix-free Laplacian: neighbor shifts via static slice + concat along
    # the grid axis (VPU/XLU only; no MXU, no (BT,G,G) broadcast).
    def evolve_step(_, f):                                   # f: (BT, G, D)
        f_prev = jnp.concatenate([f[:, :1, :], f[:, :G - 1, :]], axis=1)
        f_next = jnp.concatenate([f[:, 1:, :], f[:, G - 1:, :]], axis=1)
        lap = f_prev + f_next - 2.0 * f
        fmean = jnp.mean(f, axis=1, keepdims=True)           # (BT, 1, D)
        return f + dt_alpha * lap + dt_beta * (fmean - f)

    field = lax.fori_loop(0, NUM_STEPS, evolve_step, field, unroll=True)

    # -------- 3. FieldSampler('linear'): lane-dense transposed weights ------
    u   = jnp.clip(pos, 0.0, 1.0) * (G - 1.0)                # (BT, 1, N)
    i0f = jnp.minimum(jnp.floor(u), G - 2.0)                 # clamp so i0+1 < G
    w   = u - i0f                                            # (BT, 1, N)
    i0  = i0f.astype(jnp.int32)
    gidx = lax.broadcasted_iota(jnp.int32, (BT, G, N), 1)
    WmatT = (jnp.where(gidx == i0,     1.0 - w, 0.0)
             + jnp.where(gidx == i0 + 1, w,     0.0))        # (BT, G, N)
    sampled = jnp.einsum('bgn,bgd->bnd',
                         WmatT.astype(jnp.bfloat16), field.astype(jnp.bfloat16),
                         preferred_element_type=jnp.float32)  # (BT, N, D)

    # -------- 4. residual + LN1, Linear, dropout(eval)=id, residual + LN2 ---
    x   = (sampled + emb).reshape(BT * N, D)                 # flat slab for MXU
    mu  = jnp.mean(x, axis=-1, keepdims=True)
    var = jnp.mean((x - mu) ** 2, axis=-1, keepdims=True)
    enh = (x - mu) * lax.rsqrt(var + LN_EPS) * ln1_g + ln1_b

    y = jnp.dot(enh.astype(jnp.bfloat16), wp_ref[...],
                preferred_element_type=jnp.float32) + b_out
    # TODO(synk): dropout is identity (eval mode); training parity needs PRNG.
    z = y + enh
    mu2  = jnp.mean(z, axis=-1, keepdims=True)
    var2 = jnp.mean((z - mu2) ** 2, axis=-1, keepdims=True)
    out = (z - mu2) * lax.rsqrt(var2 + LN_EPS) * ln2_g + ln2_b

    # TODO(synk): lane-dense (BT, N*D) output layout skipped to keep the
    # consumer-facing (B, N, D) layout; D=32 stores stay lane-masked.
    out_ref[...] = out.reshape(BT, N, D)


# --------------------------- batch-tile heuristics ---------------------------
def _pick_batch_tile(B, N, D, G, budget_bytes):
    """VMEM-budgeted batch tile, counting 128-lane / 8-sublane padded sizes."""
    lane = 128
    n_pad = max(pl.cdiv(N, lane) * lane, lane)
    d_pad = max(pl.cdiv(D, lane) * lane, lane)
    g_pad = pl.cdiv(G, 8) * 8
    per_b = (4 * N * d_pad * 4            # emb + out tiles, double-buffered
             + 2 * g_pad * n_pad * 6      # K and WmatT (f32 + bf16 copies)
             + 5 * g_pad * d_pad * 4      # field + laplacian/evolution temps
             + 5 * N * d_pad * 4)         # residual / LN / linear temporaries
    bt = max(1, int(budget_bytes) // per_b)
    if B >= 2:
        bt = min(bt, pl.cdiv(B, 2))       # keep >= 2 grid steps (v7x megacore)
    return int(max(1, min(bt, B)))


# ------------------------------ wrapper --------------------------------------
def enhanced_tfn_layer(embeddings, positions, params, *, batch_tile=None):
    """embeddings: [B, N, D] f32, positions: [B, N, 1] f32 in [0, 1]."""
    B, N, D = embeddings.shape
    G = GRID_SIZE

    # ---- glue: learned positional embedding (gather in plain JAX) ----------
    # TODO(synk): assumed 'learned' strategy = nearest index of a
    # [max_seq_len, D] table; in-kernel fusion of this gather deferred.
    idx = jnp.clip(jnp.round(positions[..., 0] * (MAX_SEQ_LEN - 1)),
                   0, MAX_SEQ_LEN - 1).astype(jnp.int32)            # (B, N)
    emb_pe = (embeddings + params["pos_table"][idx]).astype(jnp.float32)

    # single lane-dense position layout (the (B, N, 1) column input is gone)
    pos_row = jnp.transpose(positions.astype(jnp.float32), (0, 2, 1))  # (B,1,N)

    # ---- glue: pack all (1, D) parameter rows; DT folded into alpha/beta ---
    packed = jnp.concatenate(
        [params["b_out"], params["ln1_g"], params["ln1_b"],
         params["ln2_g"], params["ln2_b"],
         DT * params["alpha"], DT * params["beta"],
         jnp.zeros((1, D), jnp.float32)], axis=0)                   # (8, D)

    w_out_bf = params["w_out_t"].astype(jnp.bfloat16)               # (D, D)

    # ---- VMEM budget: per-generation capacity (v7x 64MiB/TC, v5e/v6e 128MiB)
    try:
        vmem_cap = int(pltpu.get_tpu_info().vmem_capacity_bytes)
    except Exception:
        vmem_cap = 128 * 1024 * 1024
    budget     = min(int(vmem_cap * 0.45), 56 * 1024 * 1024)
    vmem_limit = min(int(vmem_cap * 0.75), 100 * 1024 * 1024)

    if batch_tile is None:
        BT = _pick_batch_tile(B, N, D, G, budget)
    else:
        BT = int(batch_tile)
    BT = max(1, min(BT, B))

    # pad batch to a multiple of BT (instead of degrading BT for prime B)
    B_pad = pl.cdiv(B, BT) * BT
    if B_pad != B:
        pad = B_pad - B
        emb_pe  = jnp.concatenate(
            [emb_pe, jnp.zeros((pad, N, D), jnp.float32)], axis=0)
        pos_row = jnp.concatenate(
            [pos_row, jnp.zeros((pad, 1, N), jnp.float32)], axis=0)

    flops = (2 * B_pad * G * N * D                 # RBF projection matmul
             + NUM_STEPS * 8 * B_pad * G * D       # matrix-free dynamics
             + 2 * B_pad * N * G * D               # sampler matmul
             + 2 * B_pad * N * D * D)              # output projection
    cost = pl.CostEstimate(
        flops=flops,
        transcendentals=B_pad * G * N + 2 * B_pad * N,
        bytes_accessed=4 * (2 * B_pad * N * D + B_pad * N) + 2 * D * D + 32 * D)

    out = pl.pallas_call(
        tfn_layer_kernel,
        out_shape=jax.ShapeDtypeStruct((B_pad, N, D), jnp.float32),
        grid=(B_pad // BT,),
        in_specs=[
            pl.BlockSpec((BT, 1, N), lambda b: (b, 0, 0)),   # positions (row)
            pl.BlockSpec((BT, N, D), lambda b: (b, 0, 0)),   # embeddings
            pl.BlockSpec((D, D),     lambda b: (0, 0)),      # W_out^T (bf16)
            pl.BlockSpec((8, D),     lambda b: (0, 0)),      # packed params
        ],
        out_specs=pl.BlockSpec((BT, N, D), lambda b: (b, 0, 0)),
        compiler_params=pltpu.CompilerParams(
            dimension_semantics=("parallel",),
            vmem_limit_bytes=vmem_limit),
        cost_estimate=cost,
    )(pos_row, emb_pe, w_out_bf, packed)
    return out[:B]


# --------------------------- deterministic params ----------------------------
def init_params(key, embed_dim):
    k1, k2 = jax.random.split(key, 2)
    w_out = jax.random.normal(k1, (embed_dim, embed_dim), jnp.float32) \
            * (1.0 / jnp.sqrt(embed_dim))
    return {
        "pos_table": jax.random.normal(k2, (MAX_SEQ_LEN, embed_dim),
                                       jnp.float32) * 0.02,
        "w_out_t":   w_out.T,                                    # pre-transposed
        "b_out":     jnp.zeros((1, embed_dim), jnp.float32),
        "ln1_g":     jnp.ones((1, embed_dim), jnp.float32),
        "ln1_b":     jnp.zeros((1, embed_dim), jnp.float32),
        "ln2_g":     jnp.ones((1, embed_dim), jnp.float32),
        "ln2_b":     jnp.zeros((1, embed_dim), jnp.float32),
        "alpha":     jnp.full((1, embed_dim), 0.05, jnp.float32),  # diffusion
        "beta":      jnp.full((1, embed_dim), 0.02, jnp.float32),  # interference
    }


# ----------------------------------- main ------------------------------------
if __name__ == "__main__":
    B, N, D = 2, 8, EMBED_DIM
    key = jax.random.PRNGKey(0)
    k_emb, k_pos, k_par = jax.random.split(key, 3)

    embeddings = jax.random.normal(k_emb, (B, N, D), jnp.float32)
    positions = jax.random.uniform(k_pos, (B, N, 1), jnp.float32)   # in [0, 1]
    params = init_params(k_par, D)

    out = jax.jit(enhanced_tfn_layer)(embeddings, positions, params)
    out = jax.block_until_ready(out)

    assert out.shape == (B, N, D)
    assert bool(jnp.all(jnp.isfinite(out)))
    print("KERNEL_OK")
</pallas_src>

<mosaic_0001>
module attributes {stable_mosaic.version = 11 : i64} {
  func.func @tfn_layer_kernel(%arg0: i32, %arg1: memref<1x1x8xf32, #tpu.memory_space<vmem>>, %arg2: memref<1x8x32xf32, #tpu.memory_space<vmem>>, %arg3: memref<32x32xbf16, #tpu.memory_space<vmem>>, %arg4: memref<8x32xf32, #tpu.memory_space<vmem>>, %arg5: memref<1x8x32xf32, #tpu.memory_space<vmem>>) attributes {dimension_semantics = [#tpu.dimension_semantics<parallel>], iteration_bounds = array<i64: 2>, scalar_prefetch = 0 : i64, scratch_operands = 0 : i64, tpu.core_type = #tpu.core_type<tc>, window_params = [{transform_indices = @transform_0, window_bounds = array<i64: 1, 1, 8>}, {transform_indices = @transform_1, window_bounds = array<i64: 1, 8, 32>}, {pipeline_mode = #tpu.pipeline_mode<synchronous>, transform_indices = @transform_2, window_bounds = array<i64: 32, 32>}, {pipeline_mode = #tpu.pipeline_mode<synchronous>, transform_indices = @transform_3, window_bounds = array<i64: 8, 32>}, {transform_indices = @transform_4, window_bounds = array<i64: 1, 8, 32>}]} {
    %c0 = arith.constant 0 : index
    %c0_0 = arith.constant 0 : index
    %c0_1 = arith.constant 0 : index
    %0 = vector.load %arg2[%c0, %c0_0, %c0_1] : memref<1x8x32xf32, #tpu.memory_space<vmem>>, vector<1x8x32xf32>
    %c0_2 = arith.constant 0 : index
    %c0_3 = arith.constant 0 : index
    %c0_4 = arith.constant 0 : index
    %1 = vector.load %arg1[%c0_2, %c0_3, %c0_4] : memref<1x1x8xf32, #tpu.memory_space<vmem>>, vector<1x1x8xf32>
    %c0_5 = arith.constant 0 : index
    %c0_6 = arith.constant 0 : index
    %2 = vector.load %arg4[%c0_5, %c0_6] : memref<8x32xf32, #tpu.memory_space<vmem>>, vector<8x32xf32>
    %3 = vector.extract_strided_slice %2 {offsets = [0, 0], sizes = [1, 32], strides = [1, 1]} : vector<8x32xf32> to vector<1x32xf32>
    %4 = vector.extract_strided_slice %2 {offsets = [1, 0], sizes = [1, 32], strides = [1, 1]} : vector<8x32xf32> to vector<1x32xf32>
    %5 = vector.extract_strided_slice %2 {offsets = [2, 0], sizes = [1, 32], strides = [1, 1]} : vector<8x32xf32> to vector<1x32xf32>
    %6 = vector.extract_strided_slice %2 {offsets = [3, 0], sizes = [1, 32], strides = [1, 1]} : vector<8x32xf32> to vector<1x32xf32>
    %7 = vector.extract_strided_slice %2 {offsets = [4, 0], sizes = [1, 32], strides = [1, 1]} : vector<8x32xf32> to vector<1x32xf32>
    %8 = vector.extract_strided_slice %2 {offsets = [5, 0], sizes = [1, 32], strides = [1, 1]} : vector<8x32xf32> to vector<1x32xf32>
    %9 = vector.shape_cast %8 : vector<1x32xf32> to vector<1x1x32xf32>
    %10 = vector.extract_strided_slice %2 {offsets = [6, 0], sizes = [1, 32], strides = [1, 1]} : vector<8x32xf32> to vector<1x32xf32>
    %11 = vector.shape_cast %10 : vector<1x32xf32> to vector<1x1x32xf32>
    %12 = tpu.iota {dimensions = array<i32: 1>} : vector<1x100x1xi32>
    %13 = arith.sitofp %12 : vector<1x100x1xi32> to vector<1x100x1xf32>
    %cst = arith.constant 0.0101010101 : f32
    %14 = vector.broadcast %cst : f32 to vector<1x100x1xf32>
    %15 = arith.mulf %13, %14 : vector<1x100x1xf32>
    %16 = vector.broadcast %15 : vector<1x100x1xf32> to vector<1x100x8xf32>
    %17 = vector.broadcast %1 : vector<1x1x8xf32> to vector<1x100x8xf32>
    %18 = arith.subf %16, %17 : vector<1x100x8xf32>
    %19 = arith.mulf %18, %18 : vector<1x100x8xf32>
    %cst_7 = arith.constant 0.000000e+00 : f32
    %20 = vector.broadcast %cst_7 : f32 to vector<1x100x8xf32>
    %21 = arith.subf %20, %19 : vector<1x100x8xf32>
    %cst_8 = arith.constant 1.250000e+01 : f32
    %22 = vector.broadcast %cst_8 : f32 to vector<1x100x8xf32>
    %23 = arith.mulf %21, %22 : vector<1x100x8xf32>
    %24 = math.exp %23 : vector<1x100x8xf32>
    %25 = arith.truncf %24 : vector<1x100x8xf32> to vector<1x100x8xbf16>
    %26 = arith.truncf %0 : vector<1x8x32xf32> to vector<1x8x32xbf16>
    "tpu.trace_start"() <{level = 10 : i32, message = "bgn,bnd->bgd"}> : () -> ()
    %cst_9 = arith.constant dense<0.000000e+00> : vector<1x100x32xf32>
    %27 = tpu.matmul %25, %26, %cst_9 {dimension_numbers = #tpu.dot_dimension_numbers<[2], [1], [1], [2], [0, 0, 0, 1, 1, 2], [0], [0]>} : vector<1x100x8xbf16>, vector<1x8x32xbf16>, vector<1x100x32xf32> -> vector<1x100x32xf32>
    "tpu.trace_stop"() : () -> ()
    %c0_i32 = arith.constant 0 : i32
    %28 = vector.extract_strided_slice %27 {offsets = [0, 0, 0], sizes = [1, 1, 32], strides = [1, 1, 1]} : vector<1x100x32xf32> to vector<1x1x32xf32>
    %29 = vector.extract_strided_slice %27 {offsets = [0, 0, 0], sizes = [1, 99, 32], strides = [1, 1, 1]} : vector<1x100x32xf32> to vector<1x99x32xf32>
    %30 = tpu.concatenate %28, %29 in 1 : vector<1x1x32xf32>, vector<1x99x32xf32> -> vector<1x100x32xf32>
    %31 = vector.extract_strided_slice %27 {offsets = [0, 1, 0], sizes = [1, 99, 32], strides = [1, 1, 1]} : vector<1x100x32xf32> to vector<1x99x32xf32>
    %32 = vector.extract_strided_slice %27 {offsets = [0, 99, 0], sizes = [1, 1, 32], strides = [1, 1, 1]} : vector<1x100x32xf32> to vector<1x1x32xf32>
    %33 = tpu.concatenate %31, %32 in 1 : vector<1x99x32xf32>, vector<1x1x32xf32> -> vector<1x100x32xf32>
    %34 = arith.addf %30, %33 : vector<1x100x32xf32>
    %cst_10 = arith.constant 2.000000e+00 : f32
    %35 = vector.broadcast %cst_10 : f32 to vector<1x100x32xf32>
    %36 = arith.mulf %35, %27 : vector<1x100x32xf32>
    %37 = arith.subf %34, %36 : vector<1x100x32xf32>
    %cst_11 = arith.constant dense<0.000000e+00> : vector<1x32xf32>
    %38 = vector.multi_reduction <add>, %27, %cst_11 [1] : vector<1x100x32xf32> to vector<1x32xf32>
    %39 = vector.shape_cast %38 : vector<1x32xf32> to vector<1x1x32xf32>
    %cst_12 = arith.constant 1.000000e+02 : f32
    %40 = vector.broadcast %cst_12 : f32 to vector<1x1x32xf32>
    %41 = arith.divf %39, %40 : vector<1x1x32xf32>
    %42 = vector.broadcast %9 : vector<1x1x32xf32> to vector<1x100x32xf32>
    %43 = arith.mulf %42, %37 : vector<1x100x32xf32>
    %44 = arith.addf %27, %43 : vector<1x100x32xf32>
    %45 = vector.broadcast %41 : vector<1x1x32xf32> to vector<1x100x32xf32>
    %46 = arith.subf %45, %27 : vector<1x100x32xf32>
    %47 = vector.broadcast %11 : vector<1x1x32xf32> to vector<1x100x32xf32>
    %48 = arith.mulf %47, %46 : vector<1x100x32xf32>
    %49 = arith.addf %44, %48 : vector<1x100x32xf32>
    %c1_i32 = arith.constant 1 : i32
    %50 = vector.extract_strided_slice %49 {offsets = [0, 0, 0], sizes = [1, 1, 32], strides = [1, 1, 1]} : vector<1x100x32xf32> to vector<1x1x32xf32>
    %51 = vector.extract_strided_slice %49 {offsets = [0, 0, 0], sizes = [1, 99, 32], strides = [1, 1, 1]} : vector<1x100x32xf32> to vector<1x99x32xf32>
    %52 = tpu.concatenate %50, %51 in 1 : vector<1x1x32xf32>, vector<1x99x32xf32> -> vector<1x100x32xf32>
    %53 = vector.extract_strided_slice %49 {offsets = [0, 1, 0], sizes = [1, 99, 32], strides = [1, 1, 1]} : vector<1x100x32xf32> to vector<1x99x32xf32>
    %54 = vector.extract_strided_slice %49 {offsets = [0, 99, 0], sizes = [1, 1, 32], strides = [1, 1, 1]} : vector<1x100x32xf32> to vector<1x1x32xf32>
    %55 = tpu.concatenate %53, %54 in 1 : vector<1x99x32xf32>, vector<1x1x32xf32> -> vector<1x100x32xf32>
    %56 = arith.addf %52, %55 : vector<1x100x32xf32>
    %cst_13 = arith.constant 2.000000e+00 : f32
    %57 = vector.broadcast %cst_13 : f32 to vector<1x100x32xf32>
    %58 = arith.mulf %57, %49 : vector<1x100x32xf32>
    %59 = arith.subf %56, %58 : vector<1x100x32xf32>
    %cst_14 = arith.constant dense<0.000000e+00> : vector<1x32xf32>
    %60 = vector.multi_reduction <add>, %49, %cst_14 [1] : vector<1x100x32xf32> to vector<1x32xf32>
    %61 = vector.shape_cast %60 : vector<1x32xf32> to vector<1x1x32xf32>
    %cst_15 = arith.constant 1.000000e+02 : f32
    %62 = vector.broadcast %cst_15 : f32 to vector<1x1x32xf32>
    %63 = arith.divf %61, %62 : vector<1x1x32xf32>
    %64 = vector.broadcast %9 : vector<1x1x32xf32> to vector<1x100x32xf32>
    %65 = arith.mulf %64, %59 : vector<1x100x32xf32>
    %66 = arith.addf %49, %65 : vector<1x100x32xf32>
    %67 = vector.broadcast %63 : vector<1x1x32xf32> to vector<1x100x32xf32>
    %68 = arith.subf %67, %49 : vector<1x100x32xf32>
    %69 = vector.broadcast %11 : vector<1x1x32xf32> to vector<1x100x32xf32>
    %70 = arith.mulf %69, %68 : vector<1x100x32xf32>
    %71 = arith.addf %66, %70 : vector<1x100x32xf32>
    %c2_i32 = arith.constant 2 : i32
    %72 = vector.extract_strided_slice %71 {offsets = [0, 0, 0], sizes = [1, 1, 32], strides = [1, 1, 1]} : vector<1x100x32xf32> to vector<1x1x32xf32>
    %73 = vector.extract_strided_slice %71 {offsets = [0, 0, 0], sizes = [1, 99, 32], strides = [1, 1, 1]} : vector<1x100x32xf32> to vector<1x99x32xf32>
    %74 = tpu.concatenate %72, %73 in 1 : vector<1x1x32xf32>, vector<1x99x32xf32> -> vector<1x100x32xf32>
    %75 = vector.extract_strided_slice %71 {offsets = [0, 1, 0], sizes = [1, 99, 32], strides = [1, 1, 1]} : vector<1x100x32xf32> to vector<1x99x32xf32>
    %76 = vector.extract_strided_slice %71 {offsets = [0, 99, 0], sizes = [1, 1, 32], strides = [1, 1, 1]} : vector<1x100x32xf32> to vector<1x1x32xf32>
    %77 = tpu.concatenate %75, %76 in 1 : vector<1x99x32xf32>, vector<1x1x32xf32> -> vector<1x100x32xf32>
    %78 = arith.addf %74, %77 : vector<1x100x32xf32>
    %cst_16 = arith.constant 2.000000e+00 : f32
    %79 = vector.broadcast %cst_16 : f32 to vector<1x100x32xf32>
    %80 = arith.mulf %79, %71 : vector<1x100x32xf32>
    %81 = arith.subf %78, %80 : vector<1x100x32xf32>
    %cst_17 = arith.constant dense<0.000000e+00> : vector<1x32xf32>
    %82 = vector.multi_reduction <add>, %71, %cst_17 [1] : vector<1x100x32xf32> to vector<1x32xf32>
    %83 = vector.shape_cast %82 : vector<1x32xf32> to vector<1x1x32xf32>
    %cst_18 = arith.constant 1.000000e+02 : f32
    %84 = vector.broadcast %cst_18 : f32 to vector<1x1x32xf32>
    %85 = arith.divf %83, %84 : vector<1x1x32xf32>
    %86 = vector.broadcast %9 : vector<1x1x32xf32> to vector<1x100x32xf32>
    %87 = arith.mulf %86, %81 : vector<1x100x32xf32>
    %88 = arith.addf %71, %87 : vector<1x100x32xf32>
    %89 = vector.broadcast %85 : vector<1x1x32xf32> to vector<1x100x32xf32>
    %90 = arith.subf %89, %71 : vector<1x100x32xf32>
    %91 = vector.broadcast %11 : vector<1x1x32xf32> to vector<1x100x32xf32>
    %92 = arith.mulf %91, %90 : vector<1x100x32xf32>
    %93 = arith.addf %88, %92 : vector<1x100x32xf32>
    %c3_i32 = arith.constant 3 : i32
    %94 = vector.extract_strided_slice %93 {offsets = [0, 0, 0], sizes = [1, 1, 32], strides = [1, 1, 1]} : vector<1x100x32xf32> to vector<1x1x32xf32>
    %95 = vector.extract_strided_slice %93 {offsets = [0, 0, 0], sizes = [1, 99, 32], strides = [1, 1, 1]} : vector<1x100x32xf32> to vector<1x99x32xf32>
    %96 = tpu.concatenate %94, %95 in 1 : vector<1x1x32xf32>, vector<1x99x32xf32> -> vector<1x100x32xf32>
    %97 = vector.extract_strided_slice %93 {offsets = [0, 1, 0], sizes = [1, 99, 32], strides = [1, 1, 1]} : vector<1x100x32xf32> to vector<1x99x32xf32>
    %98 = vector.extract_strided_slice %93 {offsets = [0, 99, 0], sizes = [1, 1, 32], strides = [1, 1, 1]} : vector<1x100x32xf32> to vector<1x1x32xf32>
    %99 = tpu.concatenate %97, %98 in 1 : vector<1x99x32xf32>, vector<1x1x32xf32> -> vector<1x100x32xf32>
    %100 = arith.addf %96, %99 : vector<1x100x32xf32>
    %cst_19 = arith.constant 2.000000e+00 : f32
    %101 = vector.broadcast %cst_19 : f32 to vector<1x100x32xf32>
    %102 = arith.mulf %101, %93 : vector<1x100x32xf32>
    %103 = arith.subf %100, %102 : vector<1x100x32xf32>
    %cst_20 = arith.constant dense<0.000000e+00> : vector<1x32xf32>
    %104 = vector.multi_reduction <add>, %93, %cst_20 [1] : vector<1x100x32xf32> to vector<1x32xf32>
    %105 = vector.shape_cast %104 : vector<1x32xf32> to vector<1x1x32xf32>
    %cst_21 = arith.constant 1.000000e+02 : f32
    %106 = vector.broadcast %cst_21 : f32 to vector<1x1x32xf32>
    %107 = arith.divf %105, %106 : vector<1x1x32xf32>
    %108 = vector.broadcast %9 : vector<1x1x32xf32> to vector<1x100x32xf32>
    %109 = arith.mulf %108, %103 : vector<1x100x32xf32>
    %110 = arith.addf %93, %109 : vector<1x100x32xf32>
    %111 = vector.broadcast %107 : vector<1x1x32xf32> to vector<1x100x32xf32>
    %112 = arith.subf %111, %93 : vector<1x100x32xf32>
    %113 = vector.broadcast %11 : vector<1x1x32xf32> to vector<1x100x32xf32>
    %114 = arith.mulf %113, %112 : vector<1x100x32xf32>
    %115 = arith.addf %110, %114 : vector<1x100x32xf32>
    %cst_22 = arith.constant 0.000000e+00 : f32
    %cst_23 = arith.constant 1.000000e+00 : f32
    %116 = vector.broadcast %cst_22 : f32 to vector<1x1x8xf32>
    %117 = arith.maximumf %116, %1 : vector<1x1x8xf32>
    %118 = vector.broadcast %cst_23 : f32 to vector<1x1x8xf32>
    %119 = arith.minimumf %118, %117 : vector<1x1x8xf32>
    %cst_24 = arith.constant 9.900000e+01 : f32
    %120 = vector.broadcast %cst_24 : f32 to vector<1x1x8xf32>
    %121 = arith.mulf %119, %120 : vector<1x1x8xf32>
    %122 = math.floor %121 : vector<1x1x8xf32>
    %cst_25 = arith.constant 9.800000e+01 : f32
    %123 = vector.broadcast %cst_25 : f32 to vector<1x1x8xf32>
    %124 = arith.minimumf %122, %123 : vector<1x1x8xf32>
    %125 = arith.subf %121, %124 : vector<1x1x8xf32>
    %126 = arith.fptosi %124 : vector<1x1x8xf32> to vector<1x1x8xi32>
    %127 = tpu.iota {dimensions = array<i32: 1>} : vector<1x100x8xi32>
    %128 = vector.broadcast %126 : vector<1x1x8xi32> to vector<1x100x8xi32>
    %129 = arith.cmpi eq, %127, %128 : vector<1x100x8xi32>
    %cst_26 = arith.constant 1.000000e+00 : f32
    %130 = vector.broadcast %cst_26 : f32 to vector<1x1x8xf32>
    %131 = arith.subf %130, %125 : vector<1x1x8xf32>
    %cst_27 = arith.constant 0.000000e+00 : f32
    %132 = vector.shape_cast %131 : vector<1x1x8xf32> to vector<1x1x8xf32>
    %133 = vector.broadcast %132 : vector<1x1x8xf32> to vector<1x100x8xf32>
    %134 = vector.broadcast %cst_27 : f32 to vector<1x100x8xf32>
    %135 = arith.select %129, %133, %134 : vector<1x100x8xi1>, vector<1x100x8xf32>
    %c1_i32_28 = arith.constant 1 : i32
    %136 = vector.broadcast %c1_i32_28 : i32 to vector<1x1x8xi32>
    %137 = arith.addi %126, %136 : vector<1x1x8xi32>
    %138 = vector.broadcast %137 : vector<1x1x8xi32> to vector<1x100x8xi32>
    %139 = arith.cmpi eq, %127, %138 : vector<1x100x8xi32>
    %cst_29 = arith.constant 0.000000e+00 : f32
    %140 = vector.shape_cast %125 : vector<1x1x8xf32> to vector<1x1x8xf32>
    %141 = vector.broadcast %140 : vector<1x1x8xf32> to vector<1x100x8xf32>
    %142 = vector.broadcast %cst_29 : f32 to vector<1x100x8xf32>
    %143 = arith.select %139, %141, %142 : vector<1x100x8xi1>, vector<1x100x8xf32>
    %144 = arith.addf %135, %143 : vector<1x100x8xf32>
    %145 = arith.truncf %144 : vector<1x100x8xf32> to vector<1x100x8xbf16>
    %146 = arith.truncf %115 : vector<1x100x32xf32> to vector<1x100x32xbf16>
    "tpu.trace_start"() <{level = 10 : i32, message = "bgn,bgd->bnd"}> : () -> ()
    %cst_30 = arith.constant dense<0.000000e+00> : vector<1x8x32xf32>
    %147 = tpu.matmul %145, %146, %cst_30 {dimension_numbers = #tpu.dot_dimension_numbers<[1], [1], [2], [2], [0, 0, 0, 2, 1, 2], [0], [0]>} : vector<1x100x8xbf16>, vector<1x100x32xbf16>, vector<1x8x32xf32> -> vector<1x8x32xf32>
    "tpu.trace_stop"() : () -> ()
    %148 = arith.addf %147, %0 : vector<1x8x32xf32>
    %149 = vector.shape_cast %148 : vector<1x8x32xf32> to vector<8x32xf32>
    %cst_31 = arith.constant dense<0.000000e+00> : vector<8xf32>
    %150 = vector.multi_reduction <add>, %149, %cst_31 [1] : vector<8x32xf32> to vector<8xf32>
    %151 = vector.shape_cast %150 : vector<8xf32> to vector<8x1xf32>
    %cst_32 = arith.constant 3.200000e+01 : f32
    %152 = vector.broadcast %cst_32 : f32 to vector<8x1xf32>
    %153 = arith.divf %151, %152 : vector<8x1xf32>
    %154 = vector.broadcast %153 : vector<8x1xf32> to vector<8x32xf32>
    %155 = arith.subf %149, %154 : vector<8x32xf32>
    %156 = arith.mulf %155, %155 : vector<8x32xf32>
    %cst_33 = arith.constant dense<0.000000e+00> : vector<8xf32>
    %157 = vector.multi_reduction <add>, %156, %cst_33 [1] : vector<8x32xf32> to vector<8xf32>
    %158 = vector.shape_cast %157 : vector<8xf32> to vector<8x1xf32>
    %cst_34 = arith.constant 3.200000e+01 : f32
    %159 = vector.broadcast %cst_34 : f32 to vector<8x1xf32>
    %160 = arith.divf %158, %159 : vector<8x1xf32>
    %161 = vector.broadcast %153 : vector<8x1xf32> to vector<8x32xf32>
    %162 = arith.subf %149, %161 : vector<8x32xf32>
    %cst_35 = arith.constant 9.99999974E-6 : f32
    %163 = vector.broadcast %cst_35 : f32 to vector<8x1xf32>
    %164 = arith.addf %160, %163 : vector<8x1xf32>
    %165 = math.rsqrt %164 : vector<8x1xf32>
    %166 = vector.broadcast %165 : vector<8x1xf32> to vector<8x32xf32>
    %167 = arith.mulf %162, %166 : vector<8x32xf32>
    %168 = vector.broadcast %4 : vector<1x32xf32> to vector<8x32xf32>
    %169 = arith.mulf %167, %168 : vector<8x32xf32>
    %170 = vector.broadcast %5 : vector<1x32xf32> to vector<8x32xf32>
    %171 = arith.addf %169, %170 : vector<8x32xf32>
    %172 = arith.truncf %171 : vector<8x32xf32> to vector<8x32xbf16>
    %c0_36 = arith.constant 0 : index
    %c0_37 = arith.constant 0 : index
    %173 = vector.load %arg3[%c0_36, %c0_37] : memref<32x32xbf16, #tpu.memory_space<vmem>>, vector<32x32xbf16>
    %cst_38 = arith.constant dense<0.000000e+00> : vector<8x32xf32>
    %174 = tpu.matmul %172, %173, %cst_38 {dimension_numbers = #tpu.dot_dimension_numbers<[1], [0], [0], [1], [0, 0, 1, 1], [], []>} : vector<8x32xbf16>, vector<32x32xbf16>, vector<8x32xf32> -> vector<8x32xf32>
    %175 = vector.broadcast %3 : vector<1x32xf32> to vector<8x32xf32>
    %176 = arith.addf %174, %175 : vector<8x32xf32>
    %177 = arith.addf %176, %171 : vector<8x32xf32>
    %cst_39 = arith.constant dense<0.000000e+00> : vector<8xf32>
    %178 = vector.multi_reduction <add>, %177, %cst_39 [1] : vector<8x32xf32> to vector<8xf32>
    %179 = vector.shape_cast %178 : vector<8xf32> to vector<8x1xf32>
    %cst_40 = arith.constant 3.200000e+01 : f32
    %180 = vector.broadcast %cst_40 : f32 to vector<8x1xf32>
    %181 = arith.divf %179, %180 : vector<8x1xf32>
    %182 = vector.broadcast %181 : vector<8x1xf32> to vector<8x32xf32>
    %183 = arith.subf %177, %182 : vector<8x32xf32>
    %184 = arith.mulf %183, %183 : vector<8x32xf32>
    %cst_41 = arith.constant dense<0.000000e+00> : vector<8xf32>
    %185 = vector.multi_reduction <add>, %184, %cst_41 [1] : vector<8x32xf32> to vector<8xf32>
    %186 = vector.shape_cast %185 : vector<8xf32> to vector<8x1xf32>
    %cst_42 = arith.constant 3.200000e+01 : f32
    %187 = vector.broadcast %cst_42 : f32 to vector<8x1xf32>
    %188 = arith.divf %186, %187 : vector<8x1xf32>
    %189 = vector.broadcast %181 : vector<8x1xf32> to vector<8x32xf32>
    %190 = arith.subf %177, %189 : vector<8x32xf32>
    %cst_43 = arith.constant 9.99999974E-6 : f32
    %191 = vector.broadcast %cst_43 : f32 to vector<8x1xf32>
    %192 = arith.addf %188, %191 : vector<8x1xf32>
    %193 = math.rsqrt %192 : vector<8x1xf32>
    %194 = vector.broadcast %193 : vector<8x1xf32> to vector<8x32xf32>
    %195 = arith.mulf %190, %194 : vector<8x32xf32>
    %196 = vector.broadcast %6 : vector<1x32xf32> to vector<8x32xf32>
    %197 = arith.mulf %195, %196 : vector<8x32xf32>
    %198 = vector.broadcast %7 : vector<1x32xf32> to vector<8x32xf32>
    %199 = arith.addf %197, %198 : vector<8x32xf32>
    %200 = vector.shape_cast %199 : vector<8x32xf32> to vector<1x8x32xf32>
    %c0_44 = arith.constant 0 : index
    %c0_45 = arith.constant 0 : index
    %c0_46 = arith.constant 0 : index
    %201 = vector.load %arg5[%c0_44, %c0_45, %c0_46] : memref<1x8x32xf32, #tpu.memory_space<vmem>>, vector<1x8x32xf32>
    tpu.vector_store %arg5[%c0_44, %c0_45, %c0_46], %200 {strides = array<i32>} : memref<1x8x32xf32, #tpu.memory_space<vmem>>, vector<1x8x32xf32>,
    return
  }
  func.func @transform_0(%arg0: i32) -> (i32, i32, i32) {
    %c0_i32 = arith.constant 0 : i32
    %c0_i32_0 = arith.constant 0 : i32
    %c0_i32_1 = arith.constant 0 : i32
    return %arg0, %c0_i32, %c0_i32_0 : i32, i32, i32
  }
  func.func @transform_1(%arg0: i32) -> (i32, i32, i32) {
    %c0_i32 = arith.constant 0 : i32
    %c0_i32_0 = arith.constant 0 : i32
    %c0_i32_1 = arith.constant 0 : i32
    return %arg0, %c0_i32, %c0_i32_0 : i32, i32, i32
  }
  func.func @transform_2(%arg0: i32) -> (i32, i32) {
    %c0_i32 = arith.constant 0 : i32
    %c0_i32_0 = arith.constant 0 : i32
    %c0_i32_1 = arith.constant 0 : i32
    return %c0_i32, %c0_i32_0 : i32, i32
  }
  func.func @transform_3(%arg0: i32) -> (i32, i32) {
    %c0_i32 = arith.constant 0 : i32
    %c0_i32_0 = arith.constant 0 : i32
    %c0_i32_1 = arith.constant 0 : i32
    return %c0_i32, %c0_i32_0 : i32, i32
  }
  func.func @transform_4(%arg0: i32) -> (i32, i32, i32) {
    %c0_i32 = arith.constant 0 : i32
    %c0_i32_0 = arith.constant 0 : i32
    %c0_i32_1 = arith.constant 0 : i32
    return %arg0, %c0_i32, %c0_i32_0 : i32, i32, i32
  }
}

</mosaic_0001>

<llo_original>
// kernel: enhanced_tfn_layer.1
$region0: #{enhanced_tfn_layer.1}
  #allocation0 [shape = 'u32[]', space=smem, size = 0x4, offset = 0x4, fixed_abs, tag = 'smem constant byte address 0x4 - core index']
  #allocation1 [shape = 'u32[144,128]{1,0:T(1,128)}', space=vmem, size = 0x12000, scoped, tag = 'internal scratch']
  %s0 = inlined_call_operand.vmem [shape: f32[2,1,8], index: 0, kind: input, shape index: {}]
  %s1 = inlined_call_operand.vmem [shape: f32[2,8,32], index: 1, kind: input, shape index: {}]
  %s2 = inlined_call_operand.vmem [shape: bf16[32,32], index: 2, kind: input, shape index: {}]
  %s3 = inlined_call_operand.vmem [shape: f32[8,32], index: 3, kind: input, shape index: {}]
  %s4 = inlined_call_operand.hbm [shape: f32[2,8,32], index: 4, kind: output, shape index: {}]
  %s5 = sld [smem:[#allocation0]]
  $region49: #{enhanced_tfn_layer.1} parent=0
    _
  %s7 = ssub.s32 1, %s5
  %s8 = scalar_select 0, %s7, %s5
  $region1: #{enhanced_tfn_layer.1} parent=0
    #allocation2 [shape = 'u8[8192]{0}', space=vmem, size = 0x2000, scoped, tag = 'output window, operand 0']
    #allocation3 [shape = 's32[2]{0}', space=sflag, size = 0x8, scoped, tag = 'scoped memory for enhanced_tfn_layer.1']
    %9 = vsyncpa [#allocation3], 0
    %s10 = scalar_lea.sflag [#allocation3], 1
    %11 = vsyncpa %s10, 0
    loop: start=0, step=1, limit=4
    $region2: #{enhanced_tfn_layer.1} parent=1 // loop_pre_header
      _
    $region3: #{enhanced_tfn_layer.1} parent=1 // loop_header
      %s13 = sphi 0, %s17
      %p14 = scmp.ge.s32.totalorder %s13, 4
      %s23 = sphi 0, %s25
      %s26 = sphi 0, %s23
      %s27 = sphi 0, %s26
      %s43 = sphi 0, %s27
      %s49 = sphi 0, %s51
      %s52 = sphi 0, %s49
      %s53 = sphi 0, %s52
      %s69 = sphi 0, %s53
      %s73 = sphi 0, %s73
      %s75 = sphi 0, %s73
      %s76 = sphi 0, %s75
      %s90 = sphi 0, %s76
      %s94 = sphi 0, %s94
      %s96 = sphi 0, %s94
      %s97 = sphi 0, %s96
      %s111 = sphi 0, %s97
      %s117 = sphi 0, %s119
      %s120 = sphi 0, %s117
      %s121 = sphi 0, %s120
      %s137 = sphi 0, %s121
    $region4: #{enhanced_tfn_layer.1} parent=1 // loop_header_branch
      %16 = sbr.rel (%p14) target = $region8
    $region5: #{enhanced_tfn_layer.1} parent=1 // loop_body
      %s18 = ssub.s32 %s13, 1
      %s19 = ssub.s32 %s13, 2
      %s20 = sadd.s32 %s13, 1
      %s21 = ssub.s32 %s13, %s20
      %p22 = scmp.eq.s32.totalorder %s21, 0
      %s24 = sadd.s32 %s23, 1
      %s25 = scalar_select %p22, %s23, %s24
      %p28 = pneg %p22
      %p29 = scmp.eq.s32.totalorder %s13, 1
      %p30 = por %p28, %p29
      %p31 = scmp.ne.s32.totalorder %s23, %s26
      %p32 = scmp.eq.s32.totalorder %s13, 0
      %p33 = por %p31, %p32
      %p34 = scmp.ne.s32.totalorder %s23, %s26
      %p35 = scmp.eq.s32.totalorder %s18, 1
      %p36 = por %p34, %p35
      %p37 = scmp.ne.s32.totalorder %s26, %s27
      %p38 = scmp.eq.s32.totalorder %s18, 0
      %p39 = por %p37, %p38
      %p40 = scmp.ne.s32.totalorder %s26, %s27
      %p41 = scmp.eq.s32.totalorder %s19, 1
      %p42 = por %p40, %p41
      %p44 = scmp.ne.s32.totalorder %s27, %s43
      %p45 = scmp.eq.s32.totalorder %s19, 0
      %p46 = por %p44, %p45
      %s47 = ssub.s32 %s13, %s20
      %p48 = scmp.eq.s32.totalorder %s47, 0
      %s50 = sadd.s32 %s49, 1
      %s51 = scalar_select %p48, %s49, %s50
      %p54 = pneg %p48
      %p55 = scmp.eq.s32.totalorder %s13, 1
      %p56 = por %p54, %p55
      %p57 = scmp.ne.s32.totalorder %s49, %s52
      %p58 = scmp.eq.s32.totalorder %s13, 0
      %p59 = por %p57, %p58
      %p60 = scmp.ne.s32.totalorder %s49, %s52
      %p61 = scmp.eq.s32.totalorder %s18, 1
      %p62 = por %p60, %p61
      %p63 = scmp.ne.s32.totalorder %s52, %s53
      %p64 = scmp.eq.s32.totalorder %s18, 0
      %p65 = por %p63, %p64
      %p66 = scmp.ne.s32.totalorder %s52, %s53
      %p67 = scmp.eq.s32.totalorder %s19, 1
      %p68 = por %p66, %p67
      %p70 = scmp.ne.s32.totalorder %s53, %s69
      %p71 = scmp.eq.s32.totalorder %s19, 0
      %p72 = por %p70, %p71
      %s74 = sadd.s32 %s73, 1
      %p77 = scmp.eq.s32.totalorder %s13, 1
      %p78 = scmp.ne.s32.totalorder %s73, %s75
      %p79 = scmp.eq.s32.totalorder %s13, 0
      %p80 = por %p78, %p79
      %p81 = scmp.ne.s32.totalorder %s73, %s75
      %p82 = scmp.eq.s32.totalorder %s18, 1
      %p83 = por %p81, %p82
      %p84 = scmp.ne.s32.totalorder %s75, %s76
      %p85 = scmp.eq.s32.totalorder %s18, 0
      %p86 = por %p84, %p85
      %p87 = scmp.ne.s32.totalorder %s75, %s76
      %p88 = scmp.eq.s32.totalorder %s19, 1
      %p89 = por %p87, %p88
      %p91 = scmp.ne.s32.totalorder %s76, %s90
      %p92 = scmp.eq.s32.totalorder %s19, 0
      %p93 = por %p91, %p92
      %s95 = sadd.s32 %s94, 1
      %p98 = scmp.eq.s32.totalorder %s13, 1
      %p99 = scmp.ne.s32.totalorder %s94, %s96
      %p100 = scmp.eq.s32.totalorder %s13, 0
      %p101 = por %p99, %p100
      %p102 = scmp.ne.s32.totalorder %s94, %s96
      %p103 = scmp.eq.s32.totalorder %s18, 1
      %p104 = por %p102, %p103
      %p105 = scmp.ne.s32.totalorder %s96, %s97
      %p106 = scmp.eq.s32.totalorder %s18, 0
      %p107 = por %p105, %p106
      %p108 = scmp.ne.s32.totalorder %s96, %s97
      %p109 = scmp.eq.s32.totalorder %s19, 1
      %p110 = por %p108, %p109
      %p112 = scmp.ne.s32.totalorder %s97, %s111
      %p113 = scmp.eq.s32.totalorder %s19, 0
      %p114 = por %p112, %p113
      %s115 = ssub.s32 %s13, %s20
      %p116 = scmp.eq.s32.totalorder %s115, 0
      %s118 = sadd.s32 %s117, 1
      %s119 = scalar_select %p116, %s117, %s118
      %p122 = pneg %p116
      %p123 = scmp.eq.s32.totalorder %s13, 1
      %p124 = por %p122, %p123
      %p125 = scmp.ne.s32.totalorder %s117, %s120
      %p126 = scmp.eq.s32.totalorder %s13, 0
      %p127 = por %p125, %p126
      %p128 = scmp.ne.s32.totalorder %s117, %s120
      %p129 = scmp.eq.s32.totalorder %s18, 1
      %p130 = por %p128, %p129
      %p131 = scmp.ne.s32.totalorder %s120, %s121
      %p132 = scmp.eq.s32.totalorder %s18, 0
      %p133 = por %p131, %p132
      %p134 = scmp.ne.s32.totalorder %s120, %s121
      %p135 = scmp.eq.s32.totalorder %s19, 1
      %p136 = por %p134, %p135
      %p138 = scmp.ne.s32.totalorder %s121, %s137
      %p139 = scmp.eq.s32.totalorder %s19, 0
      %p140 = por %p138, %p139
      %p141 = scmp.le.s32.totalorder 1, %s13
      %p142 = scmp.lt.s32.totalorder %s13, 3
      %p143 = pnand %p141, %p142
      %p144 = pneg %p143
      // Predicated region
      $region9: #{enhanced_tfn_layer.1} parent=5 // pred_check
        _
      $region10: #{enhanced_tfn_layer.1} parent=5 // pred_check_branch
        %146 = sbr.rel (%p143) target = $region12
      $region11: #{enhanced_tfn_layer.1} parent=5 // pred_region
        %s147 = ssub.s32 %s13, 1
        // Predicated region
        $region13: #{enhanced_tfn_layer.1} parent=11 // pred_check
          %p148 = pneg %p86
        $region14: #{enhanced_tfn_layer.1} parent=11 // pred_check_branch
          %150 = sbr.rel (%p148) target = $region16
        $region15: #{enhanced_tfn_layer.1} parent=11 // pred_region
          _
        $region16: #{enhanced_tfn_layer.1} parent=11 // pred_fallthru
          _
        // Predicated region
        $region17: #{enhanced_tfn_layer.1} parent=11 // pred_check
          %p151 = pneg %p107
        $region18: #{enhanced_tfn_layer.1} parent=11 // pred_check_branch
          %153 = sbr.rel (%p151) target = $region20
        $region19: #{enhanced_tfn_layer.1} parent=11 // pred_region
          _
        $region20: #{enhanced_tfn_layer.1} parent=11 // pred_fallthru
          _
      $region12: #{enhanced_tfn_layer.1} parent=5 // pred_fallthru
        _
      %p154 = scmp.lt.s32.totalorder %s13, 2
      // Predicated region
      $region21: #{enhanced_tfn_layer.1} parent=5 // pred_check
        %p155 = pneg %p154
      $region22: #{enhanced_tfn_layer.1} parent=5 // pred_check_branch
        %157 = sbr.rel (%p155) target = $region24
      $region23: #{enhanced_tfn_layer.1} parent=5 // pred_region
        // Predicated region
        $region25: #{enhanced_tfn_layer.1} parent=23 // pred_check
          %p158 = pneg %p33
        $region26: #{enhanced_tfn_layer.1} parent=23 // pred_check_branch
          %160 = sbr.rel (%p158) target = $region28
        $region27: #{enhanced_tfn_layer.1} parent=23 // pred_region
          %p161 = scmp.lt.s32.totalorder %s13, 1
          %s162 = scalar_select %p161, %s13, 1
          %s163 = scalar_lea.vmem %s0, %s162
        $region28: #{enhanced_tfn_layer.1} parent=23 // pred_fallthru
          _
        // Predicated region
        $region29: #{enhanced_tfn_layer.1} parent=23 // pred_check
          %p164 = pneg %p59
        $region30: #{enhanced_tfn_layer.1} parent=23 // pred_check_branch
          %166 = sbr.rel (%p164) target = $region32
        $region31: #{enhanced_tfn_layer.1} parent=23 // pred_region
          %p167 = scmp.lt.s32.totalorder %s13, 1
          %s168 = scalar_select %p167, %s13, 1
          %s169 = smul.addr %s168, 8
          %s170 = scalar_lea.vmem %s1, %s169
        $region32: #{enhanced_tfn_layer.1} parent=23 // pred_fallthru
          _
      $region24: #{enhanced_tfn_layer.1} parent=5 // pred_fallthru
        _
      %p171 = scmp.le.s32.totalorder 1, %s13
      %p172 = scmp.lt.s32.totalorder %s13, 3
      %p173 = pnand %p171, %p172
      %p174 = pneg %p173
      // Predicated region
      $region33: #{enhanced_tfn_layer.1} parent=5 // pred_check
        _
      $region34: #{enhanced_tfn_layer.1} parent=5 // pred_check_branch
        %176 = sbr.rel (%p173) target = $region36
      $region35: #{enhanced_tfn_layer.1} parent=5 // pred_region
        %s177 = ssub.s32 %s13, 1
        %p178 = scmp.lt.s32.totalorder %s18, 1
        %s179 = scalar_select %p178, %s18, 1
        %s180 = scalar_lea.vmem %s0, %s179
        %p181 = pneg %p39
        %p182 = pneg %p36
        %p183 = scmp.lt.s32.totalorder %s18, 1
        %s184 = scalar_select %p183, %s18, 1
        %s185 = smul.addr %s184, 8
        %s186 = scalar_lea.vmem %s1, %s185
        %p187 = pneg %p65
        %p188 = pneg %p62
        %p189 = pneg %p86
        %p190 = pneg %p83
        %p191 = pneg %p107
        %p192 = pneg %p104
        %p193 = pneg %p133
        %p194 = pneg %p130
        %s195 = sand.u32 %s120, 1
        %s196 = scalar_lea.sflag [#allocation3], %s195
        %s197 = sand.u32 %s120, 1
        %s198 = smul.addr %s197, 8
        %s199 = scalar_lea.vmem [#allocation2], %s198
        %p200 = scmp.lt.s32.totalorder %s18, 1
        %s201 = scalar_select %p200, %s18, 1
        %s202 = scalar_lea.vmem %s0, %s201
        %p203 = scmp.lt.s32.totalorder %s18, 1
        %s204 = scalar_select %p203, %s18, 1
        %s205 = smul.addr %s204, 8
        %s206 = scalar_lea.vmem %s1, %s205
        %v208 = vld [vmem:[%s206] sm:$0xff]
        %v209 = vld [vmem:[%s202] sm:$0x1]
        %v210 = vld [vmem:[%s3] sm:$0xff]
        %v211 = vlaneseq
        %v212 = vshrl.u32 %v211, 7
        %v213 = vadd.s32 %v212, 8
        %v214 = vadd.s32 %v212, 16
        %v215 = vadd.s32 %v212, 24
        %v216 = vadd.s32 %v212, 32
        %v217 = vadd.s32 %v212, 40
        %v218 = vadd.s32 %v212, 48
        %v219 = vadd.s32 %v212, 56
        %v220 = vadd.s32 %v212, 64
        %v221 = vadd.s32 %v212, 72
        %v222 = vadd.s32 %v212, 80
        %v223 = vadd.s32 %v212, 88
        %v224 = vadd.s32 %v212, 96
        %v225 = vcvt.s32.f32 %v212
        %v226 = vcvt.s32.f32 %v213
        %v227 = vcvt.s32.f32 %v214
        %v228 = vcvt.s32.f32 %v215
        %v229 = vcvt.s32.f32 %v216
        %v230 = vcvt.s32.f32 %v217
        %v231 = vcvt.s32.f32 %v218
        %v232 = vcvt.s32.f32 %v219
        %v233 = vcvt.s32.f32 %v220
        %v234 = vcvt.s32.f32 %v221
        %v235 = vcvt.s32.f32 %v222
        %v236 = vcvt.s32.f32 %v223
        %v237 = vcvt.s32.f32 %v224
        %v238 = vmul.f32 %v225, 0.01010101
        %v239 = vmul.f32 %v226, 0.01010101
        %v240 = vmul.f32 %v227, 0.01010101
        %v241 = vmul.f32 %v228, 0.01010101
        %v242 = vmul.f32 %v229, 0.01010101
        %v243 = vmul.f32 %v230, 0.01010101
        %v244 = vmul.f32 %v231, 0.01010101
        %v245 = vmul.f32 %v232, 0.01010101
        %v246 = vmul.f32 %v233, 0.01010101
        %v247 = vmul.f32 %v234, 0.01010101
        %v248 = vmul.f32 %v235, 0.01010101
        %v249 = vmul.f32 %v236, 0.01010101
        %v250 = vmul.f32 %v237, 0.01010101
        %v252 = vlaneseq
        %v253 = vshrl.u32 %v252, 7
        %v254 = vsub.s32 0, %v253
        %v255 = vrot.slane %v209, %v254
        %v257 = vsub.f32 %v238, %v255
        %v258 = vsub.f32 %v239, %v255
        %v259 = vsub.f32 %v240, %v255
        %v260 = vsub.f32 %v241, %v255
        %v261 = vsub.f32 %v242, %v255
        %v262 = vsub.f32 %v243, %v255
        %v263 = vsub.f32 %v244, %v255
        %v264 = vsub.f32 %v245, %v255
        %v265 = vsub.f32 %v246, %v255
        %v266 = vsub.f32 %v247, %v255
        %v267 = vsub.f32 %v248, %v255
        %v268 = vsub.f32 %v249, %v255
        %v269 = vsub.f32 %v250, %v255
        %v270 = vmul.f32 %v257, %v257
        %v271 = vmul.f32 %v258, %v258
        %v272 = vmul.f32 %v259, %v259
        %v273 = vmul.f32 %v260, %v260
        %v274 = vmul.f32 %v261, %v261
        %v275 = vmul.f32 %v262, %v262
        %v276 = vmul.f32 %v263, %v263
        %v277 = vmul.f32 %v264, %v264
        %v278 = vmul.f32 %v265, %v265
        %v279 = vmul.f32 %v266, %v266
        %v280 = vmul.f32 %v267, %v267
        %v281 = vmul.f32 %v268, %v268
        %v282 = vmul.f32 %v269, %v269
        %v283 = vsub.f32 0.0, %v270
        %v284 = vsub.f32 0.0, %v271
        %v285 = vsub.f32 0.0, %v272
        %v286 = vsub.f32 0.0, %v273
        %v287 = vsub.f32 0.0, %v274
        %v288 = vsub.f32 0.0, %v275
        %v289 = vsub.f32 0.0, %v276
        %v290 = vsub.f32 0.0, %v277
        %v291 = vsub.f32 0.0, %v278
        %v292 = vsub.f32 0.0, %v279
        %v293 = vsub.f32 0.0, %v280
        %v294 = vsub.f32 0.0, %v281
        %v295 = vsub.f32 0.0, %v282
        %v296 = vmul.f32 %v283, 12.5
        %v297 = vmul.f32 %v284, 12.5
        %v298 = vmul.f32 %v285, 12.5
        %v299 = vmul.f32 %v286, 12.5
        %v300 = vmul.f32 %v287, 12.5
        %v301 = vmul.f32 %v288, 12.5
        %v302 = vmul.f32 %v289, 12.5
        %v303 = vmul.f32 %v290, 12.5
        %v304 = vmul.f32 %v291, 12.5
        %v305 = vmul.f32 %v292, 12.5
        %v306 = vmul.f32 %v293, 12.5
        %v307 = vmul.f32 %v294, 12.5
        %v308 = vmul.f32 %v295, 12.5
        %v309 = vmul.f32 %v296, 1.442695
        %v310 = vpow.pop %v309
        %v311 = vmul.f32 %v297, 1.442695
        %v312 = vpow.pop %v311
        %v313 = vmul.f32 %v298, 1.442695
        %v314 = vpow.pop %v313
        %v315 = vmul.f32 %v299, 1.442695
        %v316 = vpow.pop %v315
        %v317 = vmul.f32 %v300, 1.442695
        %v318 = vpow.pop %v317
        %v319 = vmul.f32 %v301, 1.442695
        %v320 = vpow.pop %v319
        %v321 = vmul.f32 %v302, 1.442695
        %v322 = vpow.pop %v321
        %v323 = vmul.f32 %v303, 1.442695
        %v324 = vpow.pop %v323
        %v325 = vmul.f32 %v304, 1.442695
        %v326 = vpow.pop %v325
        %v327 = vmul.f32 %v305, 1.442695
        %v328 = vpow.pop %v327
        %v329 = vmul.f32 %v306, 1.442695
        %v330 = vpow.pop %v329
        %v331 = vmul.f32 %v307, 1.442695
        %v332 = vpow.pop %v331
        %v333 = vmul.f32 %v308, 1.442695
        %v334 = vpow.pop %v333
        %v335 = vpack.c.bf16 %v312, %v310
        %v336 = vpack.c.bf16 %v316, %v314
        %v337 = vpack.c.bf16 %v320, %v318
        %v338 = vpack.c.bf16 %v324, %v322
        %v339 = vpack.c.bf16 %v328, %v326
        %v340 = vpack.c.bf16 %v332, %v330
        %v341 = vpack.c.bf16 %v334, %v334
        %v342 = vpack.c.bf16 %v208, %v208
        %vm343 = vcmask 64512
        %v345 = vsel %vm343, %v335, 0
        %v348 = vsel %vm343, %v336, 0
        %v351 = vsel %vm343, %v337, 0
        %v354 = vsel %vm343, %v338, 0
        %v357 = vsel %vm343, %v339, 0
        %v360 = vsel %vm343, %v340, 0
        %v363 = vsel %vm343, %v341, 0
        %vm365 = vcmask 1043456
        %v367 = vsel %vm365, %v342, 0
        %369 = vmatprep.subr.bf16.mxu0 0
        %370 = vmatpush1.bf16.msra.mxu0 0
        %371 = vmatprep.subr.bf16.mxu0 0
        %372 = vmatpush1.bf16.msra.mxu0 0
        %373 = vmatprep.subr.bf16.mxu0 0
        %374 = vmatpush1.bf16.msra.mxu0 0
        %375 = vmatprep.subr.bf16.mxu0 0
        %376 = vmatpush1.bf16.msra.mxu0 0
        %377 = vmatprep.subr.bf16.mxu0 0
        %378 = vmatpush1.bf16.msra.mxu0 0
        %379 = vmatprep.subr.bf16.mxu0 0
        %380 = vmatpush1.bf16.msra.mxu0 0
        %381 = vmatprep.subr.bf16.mxu0 0
        %382 = vmatpush1.bf16.msra.mxu0 0
        %383 = vmatprep.subr.bf16.mxu0 0
        %384 = vmatpush1.bf16.msra.mxu0 %v367
        %385 = vmatprep.subr.bf16.mxu0 0
        %386 = vmatpush2.bf16.msra.mxu0 0
        %387 = vmatprep.subr.bf16.mxu0 0
        %388 = vmatpush2.bf16.msra.mxu0 0
        %389 = vmatprep.subr.bf16.mxu0 0
        %390 = vmatpush2.bf16.msra.mxu0 0
        %391 = vmatprep.subr.bf16.mxu0 0
        %392 = vmatpush2.bf16.msra.mxu0 0
        %393 = vmatprep.subr.bf16.mxu0 0
        %394 = vmatpush2.bf16.msra.mxu0 0
        %395 = vmatprep.subr.bf16.mxu0 0
        %396 = vmatpush2.bf16.msra.mxu0 0
        %397 = vmatprep.subr.bf16.mxu0 0
        %398 = vmatpush2.bf16.msra.mxu0 0
        %399 = vmatprep.subr.bf16.mxu0 0
        %400 = vmatpush2.bf16.msra.mxu0 0
        %401 = vmatprep.mubr.bf16.mxu0 0
        %402 = vmatmul.mubr.bf16.gmra.mxu0 %v345
        %v403 = vpop.f32.mrf.mxu0
        %v404 = vadd.f32 0.0, %v403
        %v405 = vpop.f32.mrf.mxu0
        %v406 = vpop.f32.mrf.mxu0
        %v407 = vadd.f32 0.0, %v406
        %v408 = vpop.f32.mrf.mxu0
        %409 = vmatprep.mubr.bf16.mxu0 0
        %410 = vmatmul.mubr.bf16.gmra.mxu0 %v348
        %v411 = vpop.f32.mrf.mxu0
        %v412 = vadd.f32 0.0, %v411
        %v413 = vpop.f32.mrf.mxu0
        %v414 = vpop.f32.mrf.mxu0
        %v415 = vadd.f32 0.0, %v414
        %v416 = vpop.f32.mrf.mxu0
        %417 = vmatprep.mubr.bf16.mxu0 0
        %418 = vmatmul.mubr.bf16.gmra.mxu0 %v351
        %v419 = vpop.f32.mrf.mxu0
        %v420 = vadd.f32 0.0, %v419
        %v421 = vpop.f32.mrf.mxu0
        %v422 = vpop.f32.mrf.mxu0
        %v423 = vadd.f32 0.0, %v422
        %v424 = vpop.f32.mrf.mxu0
        %425 = vmatprep.mubr.bf16.mxu0 0
        %426 = vmatmul.mubr.bf16.gmra.mxu0 %v354
        %v427 = vpop.f32.mrf.mxu0
        %v428 = vadd.f32 0.0, %v427
        %v429 = vpop.f32.mrf.mxu0
        %v430 = vpop.f32.mrf.mxu0
        %v431 = vadd.f32 0.0, %v430
        %v432 = vpop.f32.mrf.mxu0
        %433 = vmatprep.mubr.bf16.mxu0 0
        %434 = vmatmul.mubr.bf16.gmra.mxu0 %v357
        %v435 = vpop.f32.mrf.mxu0
        %v436 = vadd.f32 0.0, %v435
        %v437 = vpop.f32.mrf.mxu0
        %v438 = vpop.f32.mrf.mxu0
        %v439 = vadd.f32 0.0, %v438
        %v440 = vpop.f32.mrf.mxu0
        %441 = vmatprep.mubr.bf16.mxu0 0
        %442 = vmatmul.mubr.bf16.gmra.mxu0 %v360
        %v443 = vpop.f32.mrf.mxu0
        %v444 = vadd.f32 0.0, %v443
        %v445 = vpop.f32.mrf.mxu0
        %v446 = vpop.f32.mrf.mxu0
        %v447 = vadd.f32 0.0, %v446
        %v448 = vpop.f32.mrf.mxu0
        %449 = vmatprep.mubr.bf16.mxu0 0
        %450 = vmatmul.mubr.bf16.gmra.mxu0 %v363
        %v451 = vpop.f32.mrf.mxu0
        %v452 = vadd.f32 0.0, %v451
        %v453 = vpop.f32.mrf.mxu0
        %v454 = vpop.f32.mrf.mxu0
        %v455 = vpop.f32.mrf.mxu0
        %456 = vdwg.mxu0
        %vm470 = vcmask 1040384
        %v471 = vrot.slane %v404, 7
        %v472 = vrot.slane %v407, 7
        %v473 = vsel %vm470, %v471, %v472
        %v474 = vrot.slane %v412, 7
        %v475 = vsel %vm470, %v472, %v474
        %v476 = vrot.slane %v415, 7
        %v477 = vsel %vm470, %v474, %v476
        %v478 = vrot.slane %v420, 7
        %v479 = vsel %vm470, %v476, %v478
        %v480 = vrot.slane %v423, 7
        %v481 = vsel %vm470, %v478, %v480
        %v482 = vrot.slane %v428, 7
        %v483 = vsel %vm470, %v480, %v482
        %v484 = vrot.slane %v431, 7
        %v485 = vsel %vm470, %v482, %v484
        %v486 = vrot.slane %v436, 7
        %v487 = vsel %vm470, %v484, %v486
        %v488 = vrot.slane %v439, 7
        %v489 = vsel %vm470, %v486, %v488
        %v490 = vrot.slane %v444, 7
        %v491 = vsel %vm470, %v488, %v490
        %v492 = vrot.slane %v447, 7
        %v493 = vsel %vm470, %v490, %v492
        %v494 = vrot.slane %v452, 7
        %v495 = vsel %vm470, %v492, %v494
        %v509 = vsel %vm470, %v404, %v471
        %vm510 = vcmask 1046528
        %v511 = vrot.slane %v404, 1
        %v512 = vrot.slane %v407, 1
        %v513 = vsel %vm510, %v511, %v512
        %v514 = vrot.slane %v412, 1
        %v515 = vsel %vm510, %v512, %v514
        %v516 = vrot.slane %v415, 1
        %v517 = vsel %vm510, %v514, %v516
        %v518 = vrot.slane %v420, 1
        %v519 = vsel %vm510, %v516, %v518
        %v520 = vrot.slane %v423, 1
        %v521 = vsel %vm510, %v518, %v520
        %v522 = vrot.slane %v428, 1
        %v523 = vsel %vm510, %v520, %v522
        %v524 = vrot.slane %v431, 1
        %v525 = vsel %vm510, %v522, %v524
        %v526 = vrot.slane %v436, 1
        %v527 = vsel %vm510, %v524, %v526
        %v528 = vrot.slane %v439, 1
        %v529 = vsel %vm510, %v526, %v528
        %v530 = vrot.slane %v444, 1
        %v531 = vsel %vm510, %v528, %v530
        %v532 = vrot.slane %v447, 1
        %v533 = vsel %vm510, %v530, %v532
        %v534 = vrot.slane %v452, 1
        %v535 = vsel %vm510, %v532, %v534
        %vm549 = vcmask 1042432
        %v550 = vsel %vm549, %v534, %v452
        %v551 = vadd.f32 %v509, %v513
        %v552 = vadd.f32 %v473, %v515
        %v553 = vadd.f32 %v475, %v517
        %v554 = vadd.f32 %v477, %v519
        %v555 = vadd.f32 %v479, %v521
        %v556 = vadd.f32 %v481, %v523
        %v557 = vadd.f32 %v483, %v525
        %v558 = vadd.f32 %v485, %v527
        %v559 = vadd.f32 %v487, %v529
        %v560 = vadd.f32 %v489, %v531
        %v561 = vadd.f32 %v491, %v533
        %v562 = vadd.f32 %v493, %v535
        %v563 = vadd.f32 %v495, %v550
        %v564 = vmul.f32 %v404, 2.0
        %v565 = vmul.f32 %v407, 2.0
        %v566 = vmul.f32 %v412, 2.0
        %v567 = vmul.f32 %v415, 2.0
        %v568 = vmul.f32 %v420, 2.0
        %v569 = vmul.f32 %v423, 2.0
        %v570 = vmul.f32 %v428, 2.0
        %v571 = vmul.f32 %v431, 2.0
        %v572 = vmul.f32 %v436, 2.0
        %v573 = vmul.f32 %v439, 2.0
        %v574 = vmul.f32 %v444, 2.0
        %v575 = vmul.f32 %v447, 2.0
        %v576 = vmul.f32 %v452, 2.0
        %v577 = vsub.f32 %v551, %v564
        %v578 = vsub.f32 %v552, %v565
        %v579 = vsub.f32 %v553, %v566
        %v580 = vsub.f32 %v554, %v567
        %v581 = vsub.f32 %v555, %v568
        %v582 = vsub.f32 %v556, %v569
        %v583 = vsub.f32 %v557, %v570
        %v584 = vsub.f32 %v558, %v571
        %v585 = vsub.f32 %v559, %v572
        %v586 = vsub.f32 %v560, %v573
        %v587 = vsub.f32 %v561, %v574
        %v588 = vsub.f32 %v562, %v575
        %v589 = vsub.f32 %v563, %v576
        %vm590 = vcmask 261120
        %v591 = vsel %vm590, %v404, 0.0
        %v592 = vsel %vm590, %v407, 0.0
        %v593 = vadd.f32 %v591, %v592
        %v594 = vsel %vm590, %v412, 0.0
        %v595 = vadd.f32 %v593, %v594
        %v596 = vsel %vm590, %v415, 0.0
        %v597 = vadd.f32 %v595, %v596
        %v598 = vsel %vm590, %v420, 0.0
        %v599 = vadd.f32 %v597, %v598
        %v600 = vsel %vm590, %v423, 0.0
        %v601 = vadd.f32 %v599, %v600
        %v602 = vsel %vm590, %v428, 0.0
        %v603 = vadd.f32 %v601, %v602
        %v604 = vsel %vm590, %v431, 0.0
        %v605 = vadd.f32 %v603, %v604
        %v606 = vsel %vm590, %v436, 0.0
        %v607 = vadd.f32 %v605, %v606
        %v608 = vsel %vm590, %v439, 0.0
        %v609 = vadd.f32 %v607, %v608
        %v610 = vsel %vm590, %v444, 0.0
        %v611 = vadd.f32 %v609, %v610
        %v612 = vsel %vm590, %v447, 0.0
        %v613 = vadd.f32 %v611, %v612
        %vm614 = vcmask 257024
        %v615 = vsel %vm614, %v452, 0.0
        %v616 = vadd.f32 %v613, %v615
        %v617 = vrot.slane %v616, 4
        %v618 = vadd.f32 %v616, %v617
        %v619 = vrot.slane %v618, 2
        %v620 = vadd.f32 %v618, %v619
        %v621 = vrot.slane %v620, 1
        %v622 = vadd.f32 %v620, %v621
        %v623 = vrcp.pop 100.0
        %v624 = vmul.f32 %v622, %v623
        %v625 = vlaneseq
        %v626 = vshrl.u32 %v625, 7
        %v627 = vsub.s32 5, %v626
        %v628 = vrot.slane %v210, %v627
        %v629 = vmul.f32 %v628, %v577
        %v630 = vmul.f32 %v628, %v578
        %v631 = vmul.f32 %v628, %v579
        %v632 = vmul.f32 %v628, %v580
        %v633 = vmul.f32 %v628, %v581
        %v634 = vmul.f32 %v628, %v582
        %v635 = vmul.f32 %v628, %v583
        %v636 = vmul.f32 %v628, %v584
        %v637 = vmul.f32 %v628, %v585
        %v638 = vmul.f32 %v628, %v586
        %v639 = vmul.f32 %v628, %v587
        %v640 = vmul.f32 %v628, %v588
        %v641 = vmul.f32 %v628, %v589
        %v642 = vadd.f32 %v404, %v629
        %v643 = vadd.f32 %v407, %v630
        %v644 = vadd.f32 %v412, %v631
        %v645 = vadd.f32 %v415, %v632
        %v646 = vadd.f32 %v420, %v633
        %v647 = vadd.f32 %v423, %v634
        %v648 = vadd.f32 %v428, %v635
        %v649 = vadd.f32 %v431, %v636
        %v650 = vadd.f32 %v436, %v637
        %v651 = vadd.f32 %v439, %v638
        %v652 = vadd.f32 %v444, %v639
        %v653 = vadd.f32 %v447, %v640
        %v654 = vadd.f32 %v452, %v641
        %v655 = vsub.f32 %v624, %v404
        %v656 = vsub.f32 %v624, %v407
        %v657 = vsub.f32 %v624, %v412
        %v658 = vsub.f32 %v624, %v415
        %v659 = vsub.f32 %v624, %v420
        %v660 = vsub.f32 %v624, %v423
        %v661 = vsub.f32 %v624, %v428
        %v662 = vsub.f32 %v624, %v431
        %v663 = vsub.f32 %v624, %v436
        %v664 = vsub.f32 %v624, %v439
        %v665 = vsub.f32 %v624, %v444
        %v666 = vsub.f32 %v624, %v447
        %v667 = vsub.f32 %v624, %v452
        %v668 = vlaneseq
        %v669 = vshrl.u32 %v668, 7
        %v670 = vsub.s32 6, %v669
        %v671 = vrot.slane %v210, %v670
        %v672 = vmul.f32 %v671, %v655
        %v673 = vmul.f32 %v671, %v656
        %v674 = vmul.f32 %v671, %v657
        %v675 = vmul.f32 %v671, %v658
        %v676 = vmul.f32 %v671, %v659
        %v677 = vmul.f32 %v671, %v660
        %v678 = vmul.f32 %v671, %v661
        %v679 = vmul.f32 %v671, %v662
        %v680 = vmul.f32 %v671, %v663
        %v681 = vmul.f32 %v671, %v664
        %v682 = vmul.f32 %v671, %v665
        %v683 = vmul.f32 %v671, %v666
        %v684 = vmul.f32 %v671, %v667
        %v685 = vadd.f32 %v642, %v672
        %v686 = vadd.f32 %v643, %v673
        %v687 = vadd.f32 %v644, %v674
        %v688 = vadd.f32 %v645, %v675
        %v689 = vadd.f32 %v646, %v676
        %v690 = vadd.f32 %v647, %v677
        %v691 = vadd.f32 %v648, %v678
        %v692 = vadd.f32 %v649, %v679
        %v693 = vadd.f32 %v650, %v680
        %v694 = vadd.f32 %v651, %v681
        %v695 = vadd.f32 %v652, %v682
        %v696 = vadd.f32 %v653, %v683
        %v697 = vadd.f32 %v654, %v684
        %v711 = vrot.slane %v685, 7
        %v712 = vrot.slane %v686, 7
        %v713 = vsel %vm470, %v711, %v712
        %v714 = vrot.slane %v687, 7
        %v715 = vsel %vm470, %v712, %v714
        %v716 = vrot.slane %v688, 7
        %v717 = vsel %vm470, %v714, %v716
        %v718 = vrot.slane %v689, 7
        %v719 = vsel %vm470, %v716, %v718
        %v720 = vrot.slane %v690, 7
        %v721 = vsel %vm470, %v718, %v720
        %v722 = vrot.slane %v691, 7
        %v723 = vsel %vm470, %v720, %v722
        %v724 = vrot.slane %v692, 7
        %v725 = vsel %vm470, %v722, %v724
        %v726 = vrot.slane %v693, 7
        %v727 = vsel %vm470, %v724, %v726
        %v728 = vrot.slane %v694, 7
        %v729 = vsel %vm470, %v726, %v728
        %v730 = vrot.slane %v695, 7
        %v731 = vsel %vm470, %v728, %v730
        %v732 = vrot.slane %v696, 7
        %v733 = vsel %vm470, %v730, %v732
        %v734 = vrot.slane %v697, 7
        %v735 = vsel %vm470, %v732, %v734
        %v749 = vsel %vm470, %v685, %v711
        %v750 = vrot.slane %v685, 1
        %v751 = vrot.slane %v686, 1
        %v752 = vsel %vm510, %v750, %v751
        %v753 = vrot.slane %v687, 1
        %v754 = vsel %vm510, %v751, %v753
        %v755 = vrot.slane %v688, 1
        %v756 = vsel %vm510, %v753, %v755
        %v757 = vrot.slane %v689, 1
        %v758 = vsel %vm510, %v755, %v757
        %v759 = vrot.slane %v690, 1
        %v760 = vsel %vm510, %v757, %v759
        %v761 = vrot.slane %v691, 1
        %v762 = vsel %vm510, %v759, %v761
        %v763 = vrot.slane %v692, 1
        %v764 = vsel %vm510, %v761, %v763
        %v765 = vrot.slane %v693, 1
        %v766 = vsel %vm510, %v763, %v765
        %v767 = vrot.slane %v694, 1
        %v768 = vsel %vm510, %v765, %v767
        %v769 = vrot.slane %v695, 1
        %v770 = vsel %vm510, %v767, %v769
        %v771 = vrot.slane %v696, 1
        %v772 = vsel %vm510, %v769, %v771
        %v773 = vrot.slane %v697, 1
        %v774 = vsel %vm510, %v771, %v773
        %v788 = vsel %vm549, %v773, %v697
        %v789 = vadd.f32 %v749, %v752
        %v790 = vadd.f32 %v713, %v754
        %v791 = vadd.f32 %v715, %v756
        %v792 = vadd.f32 %v717, %v758
        %v793 = vadd.f32 %v719, %v760
        %v794 = vadd.f32 %v721, %v762
        %v795 = vadd.f32 %v723, %v764
        %v796 = vadd.f32 %v725, %v766
        %v797 = vadd.f32 %v727, %v768
        %v798 = vadd.f32 %v729, %v770
        %v799 = vadd.f32 %v731, %v772
        %v800 = vadd.f32 %v733, %v774
        %v801 = vadd.f32 %v735, %v788
        %v802 = vmul.f32 %v685, 2.0
        %v803 = vmul.f32 %v686, 2.0
        %v804 = vmul.f32 %v687, 2.0
        %v805 = vmul.f32 %v688, 2.0
        %v806 = vmul.f32 %v689, 2.0
        %v807 = vmul.f32 %v690, 2.0
        %v808 = vmul.f32 %v691, 2.0
        %v809 = vmul.f32 %v692, 2.0
        %v810 = vmul.f32 %v693, 2.0
        %v811 = vmul.f32 %v694, 2.0
        %v812 = vmul.f32 %v695, 2.0
        %v813 = vmul.f32 %v696, 2.0
        %v814 = vmul.f32 %v697, 2.0
        %v815 = vsub.f32 %v789, %v802
        %v816 = vsub.f32 %v790, %v803
        %v817 = vsub.f32 %v791, %v804
        %v818 = vsub.f32 %v792, %v805
        %v819 = vsub.f32 %v793, %v806
        %v820 = vsub.f32 %v794, %v807
        %v821 = vsub.f32 %v795, %v808
        %v822 = vsub.f32 %v796, %v809
        %v823 = vsub.f32 %v797, %v810
        %v824 = vsub.f32 %v798, %v811
        %v825 = vsub.f32 %v799, %v812
        %v826 = vsub.f32 %v800, %v813
        %v827 = vsub.f32 %v801, %v814
        %v828 = vsel %vm590, %v685, 0.0
        %v829 = vsel %vm590, %v686, 0.0
        %v830 = vadd.f32 %v828, %v829
        %v831 = vsel %vm590, %v687, 0.0
        %v832 = vadd.f32 %v830, %v831
        %v833 = vsel %vm590, %v688, 0.0
        %v834 = vadd.f32 %v832, %v833
        %v835 = vsel %vm590, %v689, 0.0
        %v836 = vadd.f32 %v834, %v835
        %v837 = vsel %vm590, %v690, 0.0
        %v838 = vadd.f32 %v836, %v837
        %v839 = vsel %vm590, %v691, 0.0
        %v840 = vadd.f32 %v838, %v839
        %v841 = vsel %vm590, %v692, 0.0
        %v842 = vadd.f32 %v840, %v841
        %v843 = vsel %vm590, %v693, 0.0
        %v844 = vadd.f32 %v842, %v843
        %v845 = vsel %vm590, %v694, 0.0
        %v846 = vadd.f32 %v844, %v845
        %v847 = vsel %vm590, %v695, 0.0
        %v848 = vadd.f32 %v846, %v847
        %v849 = vsel %vm590, %v696, 0.0
        %v850 = vadd.f32 %v848, %v849
        %v851 = vsel %vm614, %v697, 0.0
        %v852 = vadd.f32 %v850, %v851
        %v853 = vrot.slane %v852, 4
        %v854 = vadd.f32 %v852, %v853
        %v855 = vrot.slane %v854, 2
        %v856 = vadd.f32 %v854, %v855
        %v857 = vrot.slane %v856, 1
        %v858 = vadd.f32 %v856, %v857
        %v859 = vmul.f32 %v858, %v623
        %v860 = vmul.f32 %v628, %v815
        %v861 = vmul.f32 %v628, %v816
        %v862 = vmul.f32 %v628, %v817
        %v863 = vmul.f32 %v628, %v818
        %v864 = vmul.f32 %v628, %v819
        %v865 = vmul.f32 %v628, %v820
        %v866 = vmul.f32 %v628, %v821
        %v867 = vmul.f32 %v628, %v822
        %v868 = vmul.f32 %v628, %v823
        %v869 = vmul.f32 %v628, %v824
        %v870 = vmul.f32 %v628, %v825
        %v871 = vmul.f32 %v628, %v826
        %v872 = vmul.f32 %v628, %v827
        %v873 = vadd.f32 %v685, %v860
        %v874 = vadd.f32 %v686, %v861
        %v875 = vadd.f32 %v687, %v862
        %v876 = vadd.f32 %v688, %v863
        %v877 = vadd.f32 %v689, %v864
        %v878 = vadd.f32 %v690, %v865
        %v879 = vadd.f32 %v691, %v866
        %v880 = vadd.f32 %v692, %v867
        %v881 = vadd.f32 %v693, %v868
        %v882 = vadd.f32 %v694, %v869
        %v883 = vadd.f32 %v695, %v870
        %v884 = vadd.f32 %v696, %v871
        %v885 = vadd.f32 %v697, %v872
        %v886 = vsub.f32 %v859, %v685
        %v887 = vsub.f32 %v859, %v686
        %v888 = vsub.f32 %v859, %v687
        %v889 = vsub.f32 %v859, %v688
        %v890 = vsub.f32 %v859, %v689
        %v891 = vsub.f32 %v859, %v690
        %v892 = vsub.f32 %v859, %v691
        %v893 = vsub.f32 %v859, %v692
        %v894 = vsub.f32 %v859, %v693
        %v895 = vsub.f32 %v859, %v694
        %v896 = vsub.f32 %v859, %v695
        %v897 = vsub.f32 %v859, %v696
        %v898 = vsub.f32 %v859, %v697
        %v899 = vmul.f32 %v671, %v886
        %v900 = vmul.f32 %v671, %v887
        %v901 = vmul.f32 %v671, %v888
        %v902 = vmul.f32 %v671, %v889
        %v903 = vmul.f32 %v671, %v890
        %v904 = vmul.f32 %v671, %v891
        %v905 = vmul.f32 %v671, %v892
        %v906 = vmul.f32 %v671, %v893
        %v907 = vmul.f32 %v671, %v894
        %v908 = vmul.f32 %v671, %v895
        %v909 = vmul.f32 %v671, %v896
        %v910 = vmul.f32 %v671, %v897
        %v911 = vmul.f32 %v671, %v898
        %v912 = vadd.f32 %v873, %v899
        %v913 = vadd.f32 %v874, %v900
        %v914 = vadd.f32 %v875, %v901
        %v915 = vadd.f32 %v876, %v902
        %v916 = vadd.f32 %v877, %v903
        %v917 = vadd.f32 %v878, %v904
        %v918 = vadd.f32 %v879, %v905
        %v919 = vadd.f32 %v880, %v906
        %v920 = vadd.f32 %v881, %v907
        %v921 = vadd.f32 %v882, %v908
        %v922 = vadd.f32 %v883, %v909
        %v923 = vadd.f32 %v884, %v910
        %v924 = vadd.f32 %v885, %v911
        %v938 = vrot.slane %v912, 7
        %v939 = vrot.slane %v913, 7
        %v940 = vsel %vm470, %v938, %v939
        %v941 = vrot.slane %v914, 7
        %v942 = vsel %vm470, %v939, %v941
        %v943 = vrot.slane %v915, 7
        %v944 = vsel %vm470, %v941, %v943
        %v945 = vrot.slane %v916, 7
        %v946 = vsel %vm470, %v943, %v945
        %v947 = vrot.slane %v917, 7
        %v948 = vsel %vm470, %v945, %v947
        %v949 = vrot.slane %v918, 7
        %v950 = vsel %vm470, %v947, %v949
        %v951 = vrot.slane %v919, 7
        %v952 = vsel %vm470, %v949, %v951
        %v953 = vrot.slane %v920, 7
        %v954 = vsel %vm470, %v951, %v953
        %v955 = vrot.slane %v921, 7
        %v956 = vsel %vm470, %v953, %v955
        %v957 = vrot.slane %v922, 7
        %v958 = vsel %vm470, %v955, %v957
        %v959 = vrot.slane %v923, 7
        %v960 = vsel %vm470, %v957, %v959
        %v961 = vrot.slane %v924, 7
        %v962 = vsel %vm470, %v959, %v961
        %v976 = vsel %vm470, %v912, %v938
        %v977 = vrot.slane %v912, 1
        %v978 = vrot.slane %v913, 1
        %v979 = vsel %vm510, %v977, %v978
        %v980 = vrot.slane %v914, 1
        %v981 = vsel %vm510, %v978, %v980
        %v982 = vrot.slane %v915, 1
        %v983 = vsel %vm510, %v980, %v982
        %v984 = vrot.slane %v916, 1
        %v985 = vsel %vm510, %v982, %v984
        %v986 = vrot.slane %v917, 1
        %v987 = vsel %vm510, %v984, %v986
        %v988 = vrot.slane %v918, 1
        %v989 = vsel %vm510, %v986, %v988
        %v990 = vrot.slane %v919, 1
        %v991 = vsel %vm510, %v988, %v990
        %v992 = vrot.slane %v920, 1
        %v993 = vsel %vm510, %v990, %v992
        %v994 = vrot.slane %v921, 1
        %v995 = vsel %vm510, %v992, %v994
        %v996 = vrot.slane %v922, 1
        %v997 = vsel %vm510, %v994, %v996
        %v998 = vrot.slane %v923, 1
        %v999 = vsel %vm510, %v996, %v998
        %v1000 = vrot.slane %v924, 1
        %v1001 = vsel %vm510, %v998, %v1000
        %v1015 = vsel %vm549, %v1000, %v924
        %v1016 = vadd.f32 %v976, %v979
        %v1017 = vadd.f32 %v940, %v981
        %v1018 = vadd.f32 %v942, %v983
        %v1019 = vadd.f32 %v944, %v985
        %v1020 = vadd.f32 %v946, %v987
        %v1021 = vadd.f32 %v948, %v989
        %v1022 = vadd.f32 %v950, %v991
        %v1023 = vadd.f32 %v952, %v993
        %v1024 = vadd.f32 %v954, %v995
        %v1025 = vadd.f32 %v956, %v997
        %v1026 = vadd.f32 %v958, %v999
        %v1027 = vadd.f32 %v960, %v1001
        %v1028 = vadd.f32 %v962, %v1015
        %v1029 = vmul.f32 %v912, 2.0
        %v1030 = vmul.f32 %v913, 2.0
        %v1031 = vmul.f32 %v914, 2.0
        %v1032 = vmul.f32 %v915, 2.0
        %v1033 = vmul.f32 %v916, 2.0
        %v1034 = vmul.f32 %v917, 2.0
        %v1035 = vmul.f32 %v918, 2.0
        %v1036 = vmul.f32 %v919, 2.0
        %v1037 = vmul.f32 %v920, 2.0
        %v1038 = vmul.f32 %v921, 2.0
        %v1039 = vmul.f32 %v922, 2.0
        %v1040 = vmul.f32 %v923, 2.0
        %v1041 = vmul.f32 %v924, 2.0
        %v1042 = vsub.f32 %v1016, %v1029
        %v1043 = vsub.f32 %v1017, %v1030
        %v1044 = vsub.f32 %v1018, %v1031
        %v1045 = vsub.f32 %v1019, %v1032
        %v1046 = vsub.f32 %v1020, %v1033
        %v1047 = vsub.f32 %v1021, %v1034
        %v1048 = vsub.f32 %v1022, %v1035
        %v1049 = vsub.f32 %v1023, %v1036
        %v1050 = vsub.f32 %v1024, %v1037
        %v1051 = vsub.f32 %v1025, %v1038
        %v1052 = vsub.f32 %v1026, %v1039
        %v1053 = vsub.f32 %v1027, %v1040
        %v1054 = vsub.f32 %v1028, %v1041
        %v1055 = vsel %vm590, %v912, 0.0
        %v1056 = vsel %vm590, %v913, 0.0
        %v1057 = vadd.f32 %v1055, %v1056
        %v1058 = vsel %vm590, %v914, 0.0
        %v1059 = vadd.f32 %v1057, %v1058
        %v1060 = vsel %vm590, %v915, 0.0
        %v1061 = vadd.f32 %v1059, %v1060
        %v1062 = vsel %vm590, %v916, 0.0
        %v1063 = vadd.f32 %v1061, %v1062
        %v1064 = vsel %vm590, %v917, 0.0
        %v1065 = vadd.f32 %v1063, %v1064
        %v1066 = vsel %vm590, %v918, 0.0
        %v1067 = vadd.f32 %v1065, %v1066
        %v1068 = vsel %vm590, %v919, 0.0
        %v1069 = vadd.f32 %v1067, %v1068
        %v1070 = vsel %vm590, %v920, 0.0
        %v1071 = vadd.f32 %v1069, %v1070
        %v1072 = vsel %vm590, %v921, 0.0
        %v1073 = vadd.f32 %v1071, %v1072
        %v1074 = vsel %vm590, %v922, 0.0
        %v1075 = vadd.f32 %v1073, %v1074
        %v1076 = vsel %vm590, %v923, 0.0
        %v1077 = vadd.f32 %v1075, %v1076
        %v1078 = vsel %vm614, %v924, 0.0
        %v1079 = vadd.f32 %v1077, %v1078
        %v1080 = vrot.slane %v1079, 4
        %v1081 = vadd.f32 %v1079, %v1080
        %v1082 = vrot.slane %v1081, 2
        %v1083 = vadd.f32 %v1081, %v1082
        %v1084 = vrot.slane %v1083, 1
        %v1085 = vadd.f32 %v1083, %v1084
        %v1086 = vmul.f32 %v1085, %v623
        %v1087 = vmul.f32 %v628, %v1042
        %v1088 = vmul.f32 %v628, %v1043
        %v1089 = vmul.f32 %v628, %v1044
        %v1090 = vmul.f32 %v628, %v1045
        %v1091 = vmul.f32 %v628, %v1046
        %v1092 = vmul.f32 %v628, %v1047
        %v1093 = vmul.f32 %v628, %v1048
        %v1094 = vmul.f32 %v628, %v1049
        %v1095 = vmul.f32 %v628, %v1050
        %v1096 = vmul.f32 %v628, %v1051
        %v1097 = vmul.f32 %v628, %v1052
        %v1098 = vmul.f32 %v628, %v1053
        %v1099 = vmul.f32 %v628, %v1054
        %v1100 = vadd.f32 %v912, %v1087
        %v1101 = vadd.f32 %v913, %v1088
        %v1102 = vadd.f32 %v914, %v1089
        %v1103 = vadd.f32 %v915, %v1090
        %v1104 = vadd.f32 %v916, %v1091
        %v1105 = vadd.f32 %v917, %v1092
        %v1106 = vadd.f32 %v918, %v1093
        %v1107 = vadd.f32 %v919, %v1094
        %v1108 = vadd.f32 %v920, %v1095
        %v1109 = vadd.f32 %v921, %v1096
        %v1110 = vadd.f32 %v922, %v1097
        %v1111 = vadd.f32 %v923, %v1098
        %v1112 = vadd.f32 %v924, %v1099
        %v1113 = vsub.f32 %v1086, %v912
        %v1114 = vsub.f32 %v1086, %v913
        %v1115 = vsub.f32 %v1086, %v914
        %v1116 = vsub.f32 %v1086, %v915
        %v1117 = vsub.f32 %v1086, %v916
        %v1118 = vsub.f32 %v1086, %v917
        %v1119 = vsub.f32 %v1086, %v918
        %v1120 = vsub.f32 %v1086, %v919
        %v1121 = vsub.f32 %v1086, %v920
        %v1122 = vsub.f32 %v1086, %v921
        %v1123 = vsub.f32 %v1086, %v922
        %v1124 = vsub.f32 %v1086, %v923
        %v1125 = vsub.f32 %v1086, %v924
        %v1126 = vmul.f32 %v671, %v1113
        %v1127 = vmul.f32 %v671, %v1114
        %v1128 = vmul.f32 %v671, %v1115
        %v1129 = vmul.f32 %v671, %v1116
        %v1130 = vmul.f32 %v671, %v1117
        %v1131 = vmul.f32 %v671, %v1118
        %v1132 = vmul.f32 %v671, %v1119
        %v1133 = vmul.f32 %v671, %v1120
        %v1134 = vmul.f32 %v671, %v1121
        %v1135 = vmul.f32 %v671, %v1122
        %v1136 = vmul.f32 %v671, %v1123
        %v1137 = vmul.f32 %v671, %v1124
        %v1138 = vmul.f32 %v671, %v1125
        %v1139 = vadd.f32 %v1100, %v1126
        %v1140 = vadd.f32 %v1101, %v1127
        %v1141 = vadd.f32 %v1102, %v1128
        %v1142 = vadd.f32 %v1103, %v1129
        %v1143 = vadd.f32 %v1104, %v1130
        %v1144 = vadd.f32 %v1105, %v1131
        %v1145 = vadd.f32 %v1106, %v1132
        %v1146 = vadd.f32 %v1107, %v1133
        %v1147 = vadd.f32 %v1108, %v1134
        %v1148 = vadd.f32 %v1109, %v1135
        %v1149 = vadd.f32 %v1110, %v1136
        %v1150 = vadd.f32 %v1111, %v1137
        %v1151 = vadd.f32 %v1112, %v1138
        %v1165 = vrot.slane %v1139, 7
        %v1166 = vrot.slane %v1140, 7
        %v1167 = vsel %vm470, %v1165, %v1166
        %v1168 = vrot.slane %v1141, 7
        %v1169 = vsel %vm470, %v1166, %v1168
        %v1170 = vrot.slane %v1142, 7
        %v1171 = vsel %vm470, %v1168, %v1170
        %v1172 = vrot.slane %v1143, 7
        %v1173 = vsel %vm470, %v1170, %v1172
        %v1174 = vrot.slane %v1144, 7
        %v1175 = vsel %vm470, %v1172, %v1174
        %v1176 = vrot.slane %v1145, 7
        %v1177 = vsel %vm470, %v1174, %v1176
        %v1178 = vrot.slane %v1146, 7
        %v1179 = vsel %vm470, %v1176, %v1178
        %v1180 = vrot.slane %v1147, 7
        %v1181 = vsel %vm470, %v1178, %v1180
        %v1182 = vrot.slane %v1148, 7
        %v1183 = vsel %vm470, %v1180, %v1182
        %v1184 = vrot.slane %v1149, 7
        %v1185 = vsel %vm470, %v1182, %v1184
        %v1186 = vrot.slane %v1150, 7
        %v1187 = vsel %vm470, %v1184, %v1186
        %v1188 = vrot.slane %v1151, 7
        %v1189 = vsel %vm470, %v1186, %v1188
        %v1203 = vsel %vm470, %v1139, %v1165
        %v1204 = vrot.slane %v1139, 1
        %v1205 = vrot.slane %v1140, 1
        %v1206 = vsel %vm510, %v1204, %v1205
        %v1207 = vrot.slane %v1141, 1
        %v1208 = vsel %vm510, %v1205, %v1207
        %v1209 = vrot.slane %v1142, 1
        %v1210 = vsel %vm510, %v1207, %v1209
        %v1211 = vrot.slane %v1143, 1
        %v1212 = vsel %vm510, %v1209, %v1211
        %v1213 = vrot.slane %v1144, 1
        %v1214 = vsel %vm510, %v1211, %v1213
        %v1215 = vrot.slane %v1145, 1
        %v1216 = vsel %vm510, %v1213, %v1215
        %v1217 = vrot.slane %v1146, 1
        %v1218 = vsel %vm510, %v1215, %v1217
        %v1219 = vrot.slane %v1147, 1
        %v1220 = vsel %vm510, %v1217, %v1219
        %v1221 = vrot.slane %v1148, 1
        %v1222 = vsel %vm510, %v1219, %v1221
        %v1223 = vrot.slane %v1149, 1
        %v1224 = vsel %vm510, %v1221, %v1223
        %v1225 = vrot.slane %v1150, 1
        %v1226 = vsel %vm510, %v1223, %v1225
        %v1227 = vrot.slane %v1151, 1
        %v1228 = vsel %vm510, %v1225, %v1227
        %v1242 = vsel %vm549, %v1227, %v1151
        %v1243 = vadd.f32 %v1203, %v1206
        %v1244 = vadd.f32 %v1167, %v1208
        %v1245 = vadd.f32 %v1169, %v1210
        %v1246 = vadd.f32 %v1171, %v1212
        %v1247 = vadd.f32 %v1173, %v1214
        %v1248 = vadd.f32 %v1175, %v1216
        %v1249 = vadd.f32 %v1177, %v1218
        %v1250 = vadd.f32 %v1179, %v1220
        %v1251 = vadd.f32 %v1181, %v1222
        %v1252 = vadd.f32 %v1183, %v1224
        %v1253 = vadd.f32 %v1185, %v1226
        %v1254 = vadd.f32 %v1187, %v1228
        %v1255 = vadd.f32 %v1189, %v1242
        %v1256 = vmul.f32 %v1139, 2.0
        %v1257 = vmul.f32 %v1140, 2.0
        %v1258 = vmul.f32 %v1141, 2.0
        %v1259 = vmul.f32 %v1142, 2.0
        %v1260 = vmul.f32 %v1143, 2.0
        %v1261 = vmul.f32 %v1144, 2.0
        %v1262 = vmul.f32 %v1145, 2.0
        %v1263 = vmul.f32 %v1146, 2.0
        %v1264 = vmul.f32 %v1147, 2.0
        %v1265 = vmul.f32 %v1148, 2.0
        %v1266 = vmul.f32 %v1149, 2.0
        %v1267 = vmul.f32 %v1150, 2.0
        %v1268 = vmul.f32 %v1151, 2.0
        %v1269 = vsub.f32 %v1243, %v1256
        %v1270 = vsub.f32 %v1244, %v1257
        %v1271 = vsub.f32 %v1245, %v1258
        %v1272 = vsub.f32 %v1246, %v1259
        %v1273 = vsub.f32 %v1247, %v1260
        %v1274 = vsub.f32 %v1248, %v1261
        %v1275 = vsub.f32 %v1249, %v1262
        %v1276 = vsub.f32 %v1250, %v1263
        %v1277 = vsub.f32 %v1251, %v1264
        %v1278 = vsub.f32 %v1252, %v1265
        %v1279 = vsub.f32 %v1253, %v1266
        %v1280 = vsub.f32 %v1254, %v1267
        %v1281 = vsub.f32 %v1255, %v1268
        %v1282 = vsel %vm590, %v1139, 0.0
        %v1283 = vsel %vm590, %v1140, 0.0
        %v1284 = vadd.f32 %v1282, %v1283
        %v1285 = vsel %vm590, %v1141, 0.0
        %v1286 = vadd.f32 %v1284, %v1285
        %v1287 = vsel %vm590, %v1142, 0.0
        %v1288 = vadd.f32 %v1286, %v1287
        %v1289 = vsel %vm590, %v1143, 0.0
        %v1290 = vadd.f32 %v1288, %v1289
        %v1291 = vsel %vm590, %v1144, 0.0
        %v1292 = vadd.f32 %v1290, %v1291
        %v1293 = vsel %vm590, %v1145, 0.0
        %v1294 = vadd.f32 %v1292, %v1293
        %v1295 = vsel %vm590, %v1146, 0.0
        %v1296 = vadd.f32 %v1294, %v1295
        %v1297 = vsel %vm590, %v1147, 0.0
        %v1298 = vadd.f32 %v1296, %v1297
        %v1299 = vsel %vm590, %v1148, 0.0
        %v1300 = vadd.f32 %v1298, %v1299
        %v1301 = vsel %vm590, %v1149, 0.0
        %v1302 = vadd.f32 %v1300, %v1301
        %v1303 = vsel %vm590, %v1150, 0.0
        %v1304 = vadd.f32 %v1302, %v1303
        %v1305 = vsel %vm614, %v1151, 0.0
        %v1306 = vadd.f32 %v1304, %v1305
        %v1307 = vrot.slane %v1306, 4
        %v1308 = vadd.f32 %v1306, %v1307
        %v1309 = vrot.slane %v1308, 2
        %v1310 = vadd.f32 %v1308, %v1309
        %v1311 = vrot.slane %v1310, 1
        %v1312 = vadd.f32 %v1310, %v1311
        %v1313 = vmul.f32 %v1312, %v623
        %v1314 = vmul.f32 %v628, %v1269
        %v1315 = vmul.f32 %v628, %v1270
        %v1316 = vmul.f32 %v628, %v1271
        %v1317 = vmul.f32 %v628, %v1272
        %v1318 = vmul.f32 %v628, %v1273
        %v1319 = vmul.f32 %v628, %v1274
        %v1320 = vmul.f32 %v628, %v1275
        %v1321 = vmul.f32 %v628, %v1276
        %v1322 = vmul.f32 %v628, %v1277
        %v1323 = vmul.f32 %v628, %v1278
        %v1324 = vmul.f32 %v628, %v1279
        %v1325 = vmul.f32 %v628, %v1280
        %v1326 = vmul.f32 %v628, %v1281
        %v1327 = vadd.f32 %v1139, %v1314
        %v1328 = vadd.f32 %v1140, %v1315
        %v1329 = vadd.f32 %v1141, %v1316
        %v1330 = vadd.f32 %v1142, %v1317
        %v1331 = vadd.f32 %v1143, %v1318
        %v1332 = vadd.f32 %v1144, %v1319
        %v1333 = vadd.f32 %v1145, %v1320
        %v1334 = vadd.f32 %v1146, %v1321
        %v1335 = vadd.f32 %v1147, %v1322
        %v1336 = vadd.f32 %v1148, %v1323
        %v1337 = vadd.f32 %v1149, %v1324
        %v1338 = vadd.f32 %v1150, %v1325
        %v1339 = vadd.f32 %v1151, %v1326
        %v1340 = vsub.f32 %v1313, %v1139
        %v1341 = vsub.f32 %v1313, %v1140
        %v1342 = vsub.f32 %v1313, %v1141
        %v1343 = vsub.f32 %v1313, %v1142
        %v1344 = vsub.f32 %v1313, %v1143
        %v1345 = vsub.f32 %v1313, %v1144
        %v1346 = vsub.f32 %v1313, %v1145
        %v1347 = vsub.f32 %v1313, %v1146
        %v1348 = vsub.f32 %v1313, %v1147
        %v1349 = vsub.f32 %v1313, %v1148
        %v1350 = vsub.f32 %v1313, %v1149
        %v1351 = vsub.f32 %v1313, %v1150
        %v1352 = vsub.f32 %v1313, %v1151
        %v1353 = vmul.f32 %v671, %v1340
        %v1354 = vmul.f32 %v671, %v1341
        %v1355 = vmul.f32 %v671, %v1342
        %v1356 = vmul.f32 %v671, %v1343
        %v1357 = vmul.f32 %v671, %v1344
        %v1358 = vmul.f32 %v671, %v1345
        %v1359 = vmul.f32 %v671, %v1346
        %v1360 = vmul.f32 %v671, %v1347
        %v1361 = vmul.f32 %v671, %v1348
        %v1362 = vmul.f32 %v671, %v1349
        %v1363 = vmul.f32 %v671, %v1350
        %v1364 = vmul.f32 %v671, %v1351
        %v1365 = vmul.f32 %v671, %v1352
        %v1366 = vadd.f32 %v1327, %v1353
        %v1367 = vadd.f32 %v1328, %v1354
        %v1368 = vadd.f32 %v1329, %v1355
        %v1369 = vadd.f32 %v1330, %v1356
        %v1370 = vadd.f32 %v1331, %v1357
        %v1371 = vadd.f32 %v1332, %v1358
        %v1372 = vadd.f32 %v1333, %v1359
        %v1373 = vadd.f32 %v1334, %v1360
        %v1374 = vadd.f32 %v1335, %v1361
        %v1375 = vadd.f32 %v1336, %v1362
        %v1376 = vadd.f32 %v1337, %v1363
        %v1377 = vadd.f32 %v1338, %v1364
        %v1378 = vadd.f32 %v1339, %v1365
        %v1379 = vmax.f32 %v209, 0.0
        %v1380 = vmin.f32 %v1379, 1.0
        %v1381 = vmul.f32 %v1380, 99.0
        %v1382 = vfloor.f32 %v1381
        %v1383 = vmin.f32 %v1382, 98.0
        %v1384 = vsub.f32 %v1381, %v1383
        %v1385 = vcvt.f32.s32.to.zero.pseudo %v1383
        %v1386 = vlaneseq
        %v1387 = vshrl.u32 %v1386, 7
        %v1388 = vsub.s32 0, %v1387
        %v1389 = vrot.slane %v1385, %v1388
        %vm1390 = vcmp.eq.s32.totalorder %v212, %v1389
        %vm1391 = vcmp.eq.s32.totalorder %v213, %v1389
        %vm1392 = vcmp.eq.s32.totalorder %v214, %v1389
        %vm1393 = vcmp.eq.s32.totalorder %v215, %v1389
        %vm1394 = vcmp.eq.s32.totalorder %v216, %v1389
        %vm1395 = vcmp.eq.s32.totalorder %v217, %v1389
        %vm1396 = vcmp.eq.s32.totalorder %v218, %v1389
        %vm1397 = vcmp.eq.s32.totalorder %v219, %v1389
        %vm1398 = vcmp.eq.s32.totalorder %v220, %v1389
        %vm1399 = vcmp.eq.s32.totalorder %v221, %v1389
        %vm1400 = vcmp.eq.s32.totalorder %v222, %v1389
        %vm1401 = vcmp.eq.s32.totalorder %v223, %v1389
        %vm1402 = vcmp.eq.s32.totalorder %v224, %v1389
        %v1403 = vsub.f32 1.0, %v1384
        %v1405 = vlaneseq
        %v1406 = vshrl.u32 %v1405, 7
        %v1407 = vsub.s32 0, %v1406
        %v1408 = vrot.slane %v1403, %v1407
        %v1410 = vsel %vm1390, %v1408, 0.0
        %v1411 = vsel %vm1391, %v1408, 0.0
        %v1412 = vsel %vm1392, %v1408, 0.0
        %v1413 = vsel %vm1393, %v1408, 0.0
        %v1414 = vsel %vm1394, %v1408, 0.0
        %v1415 = vsel %vm1395, %v1408, 0.0
        %v1416 = vsel %vm1396, %v1408, 0.0
        %v1417 = vsel %vm1397, %v1408, 0.0
        %v1418 = vsel %vm1398, %v1408, 0.0
        %v1419 = vsel %vm1399, %v1408, 0.0
        %v1420 = vsel %vm1400, %v1408, 0.0
        %v1421 = vsel %vm1401, %v1408, 0.0
        %v1422 = vsel %vm1402, %v1408, 0.0
        %v1423 = vadd.s32 %v1385, 1
        %v1424 = vlaneseq
        %v1425 = vshrl.u32 %v1424, 7
        %v1426 = vsub.s32 0, %v1425
        %v1427 = vrot.slane %v1423, %v1426
        %vm1428 = vcmp.eq.s32.totalorder %v212, %v1427
        %vm1429 = vcmp.eq.s32.totalorder %v213, %v1427
        %vm1430 = vcmp.eq.s32.totalorder %v214, %v1427
        %vm1431 = vcmp.eq.s32.totalorder %v215, %v1427
        %vm1432 = vcmp.eq.s32.totalorder %v216, %v1427
        %vm1433 = vcmp.eq.s32.totalorder %v217, %v1427
        %vm1434 = vcmp.eq.s32.totalorder %v218, %v1427
        %vm1435 = vcmp.eq.s32.totalorder %v219, %v1427
        %vm1436 = vcmp.eq.s32.totalorder %v220, %v1427
        %vm1437 = vcmp.eq.s32.totalorder %v221, %v1427
        %vm1438 = vcmp.eq.s32.totalorder %v222, %v1427
        %vm1439 = vcmp.eq.s32.totalorder %v223, %v1427
        %vm1440 = vcmp.eq.s32.totalorder %v224, %v1427
        %v1442 = vlaneseq
        %v1443 = vshrl.u32 %v1442, 7
        %v1444 = vsub.s32 0, %v1443
        %v1445 = vrot.slane %v1384, %v1444
        %v1447 = vsel %vm1428, %v1445, 0.0
        %v1448 = vsel %vm1429, %v1445, 0.0
        %v1449 = vsel %vm1430, %v1445, 0.0
        %v1450 = vsel %vm1431, %v1445, 0.0
        %v1451 = vsel %vm1432, %v1445, 0.0
        %v1452 = vsel %vm1433, %v1445, 0.0
        %v1453 = vsel %vm1434, %v1445, 0.0
        %v1454 = vsel %vm1435, %v1445, 0.0
        %v1455 = vsel %vm1436, %v1445, 0.0
        %v1456 = vsel %vm1437, %v1445, 0.0
        %v1457 = vsel %vm1438, %v1445, 0.0
        %v1458 = vsel %vm1439, %v1445, 0.0
        %v1459 = vsel %vm1440, %v1445, 0.0
        %v1460 = vadd.f32 %v1410, %v1447
        %v1461 = vadd.f32 %v1411, %v1448
        %v1462 = vadd.f32 %v1412, %v1449
        %v1463 = vadd.f32 %v1413, %v1450
        %v1464 = vadd.f32 %v1414, %v1451
        %v1465 = vadd.f32 %v1415, %v1452
        %v1466 = vadd.f32 %v1416, %v1453
        %v1467 = vadd.f32 %v1417, %v1454
        %v1468 = vadd.f32 %v1418, %v1455
        %v1469 = vadd.f32 %v1419, %v1456
        %v1470 = vadd.f32 %v1420, %v1457
        %v1471 = vadd.f32 %v1421, %v1458
        %v1472 = vadd.f32 %v1422, %v1459
        %v1473 = vpack.c.bf16 %v1461, %v1460
        %v1474 = vpack.c.bf16 %v1463, %v1462
        %v1475 = vpack.c.bf16 %v1465, %v1464
        %v1476 = vpack.c.bf16 %v1467, %v1466
        %v1477 = vpack.c.bf16 %v1469, %v1468
        %v1478 = vpack.c.bf16 %v1471, %v1470
        %v1479 = vpack.c.bf16 %v1472, %v1472
        %v1480 = vpack.c.bf16 %v1367, %v1366
        %v1481 = vpack.c.bf16 %v1369, %v1368
        %v1482 = vpack.c.bf16 %v1371, %v1370
        %v1483 = vpack.c.bf16 %v1373, %v1372
        %v1484 = vpack.c.bf16 %v1375, %v1374
        %v1485 = vpack.c.bf16 %v1377, %v1376
        %v1486 = vpack.c.bf16 %v1378, %v1378
        %1487 = vxpose.xlu0.c.b16.start [1/8] %v1473, 128
        %1488 = vxpose.xlu0.c.b16.cont [2/8] %v1474, 128
        %1489 = vxpose.xlu0.c.b16.cont [3/8] %v1475, 128
        %1490 = vxpose.xlu0.c.b16.cont [4/8] %v1476, 128
        %1491 = vxpose.xlu0.c.b16.cont [5/8] %v1477, 128
        %1492 = vxpose.xlu0.c.b16.cont [6/8] %v1478, 128
        %1493 = vxpose.xlu0.c.b16.cont [7/8] %v1479, 128
        %1494 = vxpose.xlu0.c.b16.end [8/8] 0, 128
        %v1495 = vpop.trf.xlu0
        %v1496 = vpop.trf.xlu0
        %v1497 = vpop.trf.xlu0
        %v1498 = vpop.trf.xlu0
        %v1499 = vpop.trf.xlu0
        %v1500 = vpop.trf.xlu0
        %v1501 = vpop.trf.xlu0
        %v1502 = vpop.trf.xlu0
        %vm1503 = vcmask 818176
        %v1505 = vsel %vm1503, %v1495, 0
        %vm1507 = vcmask 1041408
        %v1509 = vsel %vm1507, %v1486, 0
        %1511 = vmatprep.subr.bf16.mxu0 0
        %1512 = vmatpush1.bf16.msra.mxu0 0
        %1513 = vmatprep.subr.bf16.mxu0 0
        %1514 = vmatpush1.bf16.msra.mxu0 %v1509
        %1515 = vmatprep.subr.bf16.mxu0 0
        %1516 = vmatpush1.bf16.msra.mxu0 %v1485
        %1517 = vmatprep.subr.bf16.mxu0 0
        %1518 = vmatpush1.bf16.msra.mxu0 %v1484
        %1519 = vmatprep.subr.bf16.mxu0 0
        %1520 = vmatpush1.bf16.msra.mxu0 %v1483
        %1521 = vmatprep.subr.bf16.mxu0 0
        %1522 = vmatpush1.bf16.msra.mxu0 %v1482
        %1523 = vmatprep.subr.bf16.mxu0 0
        %1524 = vmatpush1.bf16.msra.mxu0 %v1481
        %1525 = vmatprep.subr.bf16.mxu0 0
        %1526 = vmatpush1.bf16.msra.mxu0 %v1480
        %1527 = vmatprep.subr.bf16.mxu0 0
        %1528 = vmatpush2.bf16.msra.mxu0 0
        %1529 = vmatprep.subr.bf16.mxu0 0
        %1530 = vmatpush2.bf16.msra.mxu0 0
        %1531 = vmatprep.subr.bf16.mxu0 0
        %1532 = vmatpush2.bf16.msra.mxu0 0
        %1533 = vmatprep.subr.bf16.mxu0 0
        %1534 = vmatpush2.bf16.msra.mxu0 0
        %1535 = vmatprep.subr.bf16.mxu0 0
        %1536 = vmatpush2.bf16.msra.mxu0 0
        %1537 = vmatprep.subr.bf16.mxu0 0
        %1538 = vmatpush2.bf16.msra.mxu0 0
        %1539 = vmatprep.subr.bf16.mxu0 0
        %1540 = vmatpush2.bf16.msra.mxu0 0
        %1541 = vmatprep.subr.bf16.mxu0 0
        %1542 = vmatpush2.bf16.msra.mxu0 0
        %1543 = vmatprep.mubr.bf16.mxu0 0
        %1544 = vmatmul.mubr.bf16.gmra.mxu0 %v1505
        %v1545 = vpop.f32.mrf.mxu0
        %v1546 = vadd.f32 %v208, %v1545
        %v1547 = vpop.f32.mrf.mxu0
        %v1548 = vpop.f32.mrf.mxu0
        %v1549 = vpop.f32.mrf.mxu0
        %1550 = vdwg.mxu0
        %v1551 = vsel %vm590, %v1546, 0.0
        %1552 = vadd.xlane.f32.xlu0 %v1551
        %v1553 = vpop.xlane.xlu0 %1552
        %v1554 = vrcp.pop 32.0
        %v1555 = vmul.f32 %v1553, %v1554
        %v1556 = vsub.f32 %v1546, %v1555
        %v1557 = vmul.f32 %v1556, %v1556
        %v1558 = vsel %vm590, %v1557, 0.0
        %1559 = vadd.xlane.f32.xlu0 %v1558
        %v1560 = vpop.xlane.xlu0 %1559
        %v1561 = vmul.f32 %v1560, %v1554
        %v1562 = vadd.f32 %v1561, 1e-05
        %v1563 = vrsqrt.pop %v1562
        %v1564 = vmul.f32 %v1556, %v1563
        %v1565 = vlaneseq
        %v1566 = vshrl.u32 %v1565, 7
        %v1567 = vsub.s32 1, %v1566
        %v1568 = vrot.slane %v210, %v1567
        %v1569 = vmul.f32 %v1564, %v1568
        %v1570 = vlaneseq
        %v1571 = vshrl.u32 %v1570, 7
        %v1572 = vsub.s32 2, %v1571
        %v1573 = vrot.slane %v210, %v1572
        %v1574 = vadd.f32 %v1569, %v1573
        %v1575 = vpack.c.bf16 %v1574, %v1574
        %v1576 = vld [vmem:[%s2] sm:$0xf]
        %v1577 = vld [vmem:[%s2 + $0x4] sm:$0xf]
        %v1578 = vld [vmem:[%s2 + $0x8] sm:$0xf]
        %v1579 = vld [vmem:[%s2 + $0xc] sm:$0xf]
        %v1580 = vlaneseq
        %v1581 = vshrl.u32 %v1580, 7
        %v1582 = vsub.s32 0, %v1581
        %v1583 = vrot.slane %v210, %v1582
        %v1588 = vunpack.c.l.b16 %v1576
        %v1589 = vunpack.c.l.b16 %v1577
        %v1590 = vunpack.c.l.b16 %v1578
        %v1591 = vunpack.c.l.b16 %v1579
        %v1592 = vpack.c.b16 %v1589, %v1588
        %v1593 = vpack.c.b16 %v1591, %v1590
        %v1597 = vsel %vm590, %v1575, 0
        %1599 = vmatprep.subr.bf16.mxu0 0
        %1600 = vmatpush1.bf16.msra.mxu0 0
        %1601 = vmatprep.subr.bf16.mxu0 0
        %1602 = vmatpush1.bf16.msra.mxu0 0
        %1603 = vmatprep.subr.bf16.mxu0 0
        %1604 = vmatpush1.bf16.msra.mxu0 0
        %1605 = vmatprep.subr.bf16.mxu0 0
        %1606 = vmatpush1.bf16.msra.mxu0 0
        %1607 = vmatprep.subr.bf16.mxu0 0
        %1608 = vmatpush1.bf16.msra.mxu0 0
        %1609 = vmatprep.subr.bf16.mxu0 0
        %1610 = vmatpush1.bf16.msra.mxu0 0
        %1611 = vmatprep.subr.bf16.mxu0 0
        %1612 = vmatpush1.bf16.msra.mxu0 %v1593
        %1613 = vmatprep.subr.bf16.mxu0 0
        %1614 = vmatpush1.bf16.msra.mxu0 %v1592
        %1615 = vmatprep.subr.bf16.mxu0 0
        %1616 = vmatpush2.bf16.msra.mxu0 0
        %1617 = vmatprep.subr.bf16.mxu0 0
        %1618 = vmatpush2.bf16.msra.mxu0 0
        %1619 = vmatprep.subr.bf16.mxu0 0
        %1620 = vmatpush2.bf16.msra.mxu0 0
        %1621 = vmatprep.subr.bf16.mxu0 0
        %1622 = vmatpush2.bf16.msra.mxu0 0
        %1623 = vmatprep.subr.bf16.mxu0 0
        %1624 = vmatpush2.bf16.msra.mxu0 0
        %1625 = vmatprep.subr.bf16.mxu0 0
        %1626 = vmatpush2.bf16.msra.mxu0 0
        %1627 = vmatprep.subr.bf16.mxu0 0
        %1628 = vmatpush2.bf16.msra.mxu0 0
        %1629 = vmatprep.subr.bf16.mxu0 0
        %1630 = vmatpush2.bf16.msra.mxu0 0
        %1631 = vmatprep.mubr.bf16.mxu0 0
        %1632 = vmatmul.mubr.bf16.gmra.mxu0 %v1597
        %v1633 = vpop.f32.mrf.mxu0
        %v1634 = vadd.f32 %v1583, %v1633
        %v1635 = vpop.f32.mrf.mxu0
        %v1636 = vpop.f32.mrf.mxu0
        %v1637 = vpop.f32.mrf.mxu0
        %1638 = vdwg.mxu0
        %v1639 = vadd.f32 %v1634, %v1574
        %v1640 = vsel %vm590, %v1639, 0.0
        %1641 = vadd.xlane.f32.xlu0 %v1640
        %v1642 = vpop.xlane.xlu0 %1641
        %v1643 = vmul.f32 %v1642, %v1554
        %v1644 = vsub.f32 %v1639, %v1643
        %v1645 = vmul.f32 %v1644, %v1644
        %v1646 = vsel %vm590, %v1645, 0.0
        %1647 = vadd.xlane.f32.xlu0 %v1646
        %v1648 = vpop.xlane.xlu0 %1647
        %v1649 = vmul.f32 %v1648, %v1554
        %v1650 = vadd.f32 %v1649, 1e-05
        %v1651 = vrsqrt.pop %v1650
        %v1652 = vmul.f32 %v1644, %v1651
        %v1653 = vlaneseq
        %v1654 = vshrl.u32 %v1653, 7
        %v1655 = vsub.s32 3, %v1654
        %v1656 = vrot.slane %v210, %v1655
        %v1657 = vmul.f32 %v1652, %v1656
        %v1658 = vlaneseq
        %v1659 = vshrl.u32 %v1658, 7
        %v1660 = vsub.s32 4, %v1659
        %v1661 = vrot.slane %v210, %v1660
        %v1662 = vadd.f32 %v1657, %v1661
        %1663 = vst.msk [vmem:[%s199] sm:$0xff] %vm590, %v1662
        %s1664 = sand.u32 %s120, 1
        %s1665 = scalar_lea.sflag [#allocation3], %s1664
        %s1666 = sand.u32 %s120, 1
        %s1667 = smul.addr %s1666, 8
        %s1668 = scalar_lea.vmem [#allocation2], %s1667
        // Predicated region
        $region37: #{enhanced_tfn_layer.1} parent=35 // pred_check
          %p1669 = pneg %p130
        $region38: #{enhanced_tfn_layer.1} parent=35 // pred_check_branch
          %1671 = sbr.rel (%p1669) target = $region40
        $region39: #{enhanced_tfn_layer.1} parent=35 // pred_region
          %s1673 = ssub.s32 128, 128
          %1674 = vsyncadd %s1665, %s1673
          %s1675 = smul.addr %s18, 128
          %s1676 = scalar_lea.hbm %s4, %s1675
          %s1678 = sshll.u32 %s1668, 4
          %s1679 = int_to_ptr.vmem [resolvable:$true] %s1678
          %1681 = dma.vmem_to_hbm [thread:$0]  %s1679, 128, %s1676, %s1665
        $region40: #{enhanced_tfn_layer.1} parent=35 // pred_fallthru
          _
      $region36: #{enhanced_tfn_layer.1} parent=5 // pred_fallthru
        _
      %p1682 = scmp.le.s32.totalorder 2, %s13
      // Predicated region
      $region41: #{enhanced_tfn_layer.1} parent=5 // pred_check
        %p1683 = pneg %p1682
      $region42: #{enhanced_tfn_layer.1} parent=5 // pred_check_branch
        %1685 = sbr.rel (%p1683) target = $region44
      $region43: #{enhanced_tfn_layer.1} parent=5 // pred_region
        %s1686 = ssub.s32 %s13, 2
        // Predicated region
        $region45: #{enhanced_tfn_layer.1} parent=43 // pred_check
          %p1687 = pneg %p136
        $region46: #{enhanced_tfn_layer.1} parent=43 // pred_check_branch
          %1689 = sbr.rel (%p1687) target = $region48
        $region47: #{enhanced_tfn_layer.1} parent=43 // pred_region
          %s1690 = sand.u32 %s121, 1
          %s1691 = scalar_lea.sflag [#allocation3], %s1690
          %s1692 = sand.u32 %s121, 1
          %s1693 = smul.addr %s1692, 8
          %s1694 = scalar_lea.vmem [#allocation2], %s1693
          %1695 = dma.done %s1691, 128
        $region48: #{enhanced_tfn_layer.1} parent=43 // pred_fallthru
          _
      $region44: #{enhanced_tfn_layer.1} parent=5 // pred_fallthru
        _
    $region6: #{enhanced_tfn_layer.1} parent=1 // loop_footer
      %s17 = sadd.s32 1, %s13
    $region7: #{enhanced_tfn_layer.1} parent=1 // loop_footer_branch
      %12 = sbr.rel target = $region3
    $region8: #{enhanced_tfn_layer.1} parent=1 // loop_exit
      _
    %1696 = vsyncpa [#allocation3], 1
    %s1697 = scalar_lea.sflag [#allocation3], 1
    %1698 = vsyncpa %s1697, 1

</llo_original>
